<compile_context>
chip_gen: v5e
topology: v5e:2x2
jax: 0.10.0
libtpu: 0.0.40
codegen_flags: <defaults>
</compile_context>

<pallas_src>
import functools

import jax
import jax.numpy as jnp
from jax import lax
from jax.experimental import pallas as pl
from jax.experimental.pallas import tpu as pltpu


# --------------------------------------------------------------------------- #
# Kernel
# --------------------------------------------------------------------------- #
def c1_agg_kernel(x_ref, w3_ref, bnb_ref, w1_ref, b1_ref, out_ref):
    """One (batch n, row-tile t) block.

    x_ref  : (1, 1, TH+2, W, 3*Cin)  dx-im2col'ed, halo'd input rows (bf16/f32)
    w3_ref : (3, 3*Cin, Cmid)        3x3 conv weights, BN scale pre-folded
    bnb_ref: (1, Cmid)               folded BN bias (f32)
    w1_ref : (Cmid, C)               1x1 conv weight
    b1_ref : (1, C)                  1x1 conv bias (f32)
    out_ref: (1, C, TH*W)            lane-dense log-softmax output (f32)
    """
    _, _, thp2, w, k3 = x_ref.shape
    th = thp2 - 2
    cmid = w3_ref.shape[-1]
    m = th * w

    # ---- 3x3 conv as 3 per-dy matmuls (K = 3*Cin), f32 accumulation --------
    # dy slices move only the 3rd-from-last dim -> no (8,128) tile crossing,
    # no VMEM copies.  (At this Cmid the f32 accumulator fits in vregs; a
    # pltpu.VMEM scratch would be used once Cmid is large -- see TODO above.)
    acc = jnp.zeros((m, cmid), dtype=jnp.float32)
    for dy in range(3):
        rows = x_ref[0, 0, dy:dy + th, :, :].reshape(m, k3)
        acc = acc + jnp.dot(rows, w3_ref[dy],
                            preferred_element_type=jnp.float32)

    # ---- BatchNorm bias (scale already folded into w3) + ReLU, all f32 -----
    y = jnp.maximum(acc + bnb_ref[0, :], 0.0)

    # ---- 1x1 conv (MXU, bf16 in / f32 out) + bias ---------------------------
    z = jnp.dot(y.astype(w1_ref.dtype), w1_ref[...],
                preferred_element_type=jnp.float32)
    z = z + b1_ref[0, :]

    # ---- log_softmax over channels (lane-axis reduction on (M, C)) ----------
    zmax = jnp.max(z, axis=-1, keepdims=True)
    e = jnp.exp(z - zmax)
    lse = zmax + jnp.log(jnp.sum(e, axis=-1, keepdims=True))
    logp = z - lse                                   # (M, C)

    # One small XLU transpose -> lane-dense (C, M) store.
    out_ref[0, :, :] = logp.T.astype(out_ref.dtype)


# --------------------------------------------------------------------------- #
# Tiling heuristics
# --------------------------------------------------------------------------- #
def _device_vmem_bytes():
    try:
        kind = jax.devices()[0].device_kind.lower()
    except Exception:
        kind = ""
    # v7x has 64 MiB VMEM per TensorCore; v5e/v6e have 128 MiB.
    return (64 << 20) if "v7" in kind else (128 << 20)


def _auto_tile_h(H, W, K3, Cmid, C, in_itemsize, vmem_total):
    """Largest row tile (multiple of 8, divisor of H) that fits the VMEM budget."""
    budget = vmem_total // 2          # headroom for weights / compiler scratch
    w_bytes = (3 * K3 * Cmid + Cmid * C) * in_itemsize + (Cmid + C) * 4

    def need(th):
        blk_in = (th + 2) * W * K3 * in_itemsize     # double-buffered input block
        blk_out = C * th * W * 4                     # double-buffered output block
        return 2 * (blk_in + blk_out) + w_bytes

    cands = sorted({d for d in range(8, H + 1, 8) if H % d == 0} | {H},
                   reverse=True)
    for th in cands:
        if need(th) <= budget:
            return th
    return cands[-1]


# --------------------------------------------------------------------------- #
# Wrapper
# --------------------------------------------------------------------------- #
@functools.partial(jax.jit, static_argnames=("tile_h", "compute_dtype"))
def c1_aggregation_forward(x_nchw, params, *, tile_h=None,
                           compute_dtype=jnp.bfloat16):
    """x_nchw: (N, Cin, H, W) f32.  Returns (N, num_class, H, W) log-probs (f32)."""
    w3k, bn_bias, w1, b1 = params
    N, Cin, H, W = x_nchw.shape
    K3 = 3 * Cin
    Cmid = w3k.shape[-1]
    C = w1.shape[-1]

    in_item = jnp.dtype(compute_dtype).itemsize
    vmem_total = _device_vmem_bytes()
    TH = tile_h if tile_h is not None else _auto_tile_h(
        H, W, K3, Cmid, C, in_item, vmem_total)
    assert H % TH == 0, "tile_h must divide H"
    num_t = H // TH

    # ---- input prep (one fused XLA producer pass) ---------------------------
    x = jnp.transpose(x_nchw, (0, 2, 3, 1))                       # NHWC
    x = jnp.pad(x, ((0, 0), (1, 1), (1, 1), (0, 0)))              # pad=1
    # dx-only im2col: channel order [dx=0 | dx=1 | dx=2], each block of Cin.
    x = jnp.concatenate(
        [x[:, :, 0:W, :], x[:, :, 1:W + 1, :], x[:, :, 2:W + 2, :]], axis=-1)
    # Halo'd row tiles: tile t covers padded rows [t*TH, t*TH + TH + 2).
    x = jnp.stack([x[:, t * TH: t * TH + TH + 2] for t in range(num_t)], axis=1)
    x = x.astype(compute_dtype)                                   # (N,T,TH+2,W,3Cin)

    w3k_c = w3k.astype(compute_dtype)
    w1_c = w1.astype(compute_dtype)
    bnb_c = bn_bias.astype(jnp.float32)
    b1_c = b1.astype(jnp.float32)

    blk_in = (TH + 2) * W * K3 * in_item
    blk_out = C * TH * W * 4
    w_bytes = (3 * K3 * Cmid + Cmid * C) * in_item + (Cmid + C) * 4
    vmem_limit = int(min(max(2 * (blk_in + blk_out) + w_bytes + (4 << 20),
                             32 << 20),
                         vmem_total - (8 << 20)))

    out_flat = pl.pallas_call(
        c1_agg_kernel,
        out_shape=jax.ShapeDtypeStruct((N, C, H * W), jnp.float32),
        grid_spec=pltpu.PrefetchScalarGridSpec(
            num_scalar_prefetch=0,
            grid=(N, num_t),
            in_specs=[
                pl.BlockSpec((1, 1, TH + 2, W, K3),
                             lambda n, t: (n, t, 0, 0, 0)),
                pl.BlockSpec((3, K3, Cmid), lambda n, t: (0, 0, 0)),
                pl.BlockSpec((1, Cmid), lambda n, t: (0, 0)),
                pl.BlockSpec((Cmid, C), lambda n, t: (0, 0)),
                pl.BlockSpec((1, C), lambda n, t: (0, 0)),
            ],
            out_specs=pl.BlockSpec((1, C, TH * W), lambda n, t: (n, 0, t)),
        ),
        compiler_params=pltpu.CompilerParams(
            dimension_semantics=("parallel", "parallel"),
            vmem_limit_bytes=vmem_limit),
    )(x, w3k_c, bnb_c, w1_c, b1_c)

    # Lane-dense (N, C, H*W) -> NCHW is a pure reshape (no transpose pass).
    return out_flat.reshape(N, C, H, W)


# --------------------------------------------------------------------------- #
# Parameters (PyTorch-shaped init + repack for the kernel)
# --------------------------------------------------------------------------- #
def make_params(key, fc_dim, num_class):
    cin = fc_dim // 2 * 3
    cmid = fc_dim // 4
    k = jax.random.split(key, 6)

    w_conv3 = 0.05 * jax.random.normal(k[0], (cmid, cin, 3, 3), jnp.float32)
    gamma = 1.0 + 0.1 * jax.random.normal(k[1], (cmid,), jnp.float32)
    beta = 0.1 * jax.random.normal(k[2], (cmid,), jnp.float32)
    run_mean = 0.1 * jax.random.normal(k[3], (cmid,), jnp.float32)
    run_var = jnp.abs(1.0 + 0.1 * jax.random.normal(k[4], (cmid,), jnp.float32))
    eps = 1e-5
    w_conv1 = 0.05 * jax.random.normal(k[5], (num_class, cmid, 1, 1), jnp.float32)
    b_conv1 = 0.01 * jnp.arange(num_class, dtype=jnp.float32)

    # ---- repack: fold BN scale into the 3x3 weights, dx-im2col order -------
    scale = gamma / jnp.sqrt(run_var + eps)                       # (Cmid,)
    w3 = jnp.transpose(w_conv3, (2, 3, 1, 0)) * scale[None, None, None, :]
    w3k = w3.reshape(3, 3 * cin, cmid)                            # (3, 3*Cin, Cmid)
    bn_bias = (beta - run_mean * scale).reshape(1, cmid)
    w1 = jnp.transpose(w_conv1[:, :, 0, 0], (1, 0))               # (Cmid, C)
    b1 = b_conv1.reshape(1, num_class)

    kernel_params = (w3k, bn_bias, w1, b1)
    torch_like = (w_conv3, gamma, beta, run_mean, run_var, eps, w_conv1, b_conv1)
    return kernel_params, torch_like


def reference_forward(x_nchw, torch_like):
    """Plain-JAX replica of the PyTorch head (conv3x3+BN+ReLU -> conv1x1 -> log_softmax)."""
    w_conv3, gamma, beta, run_mean, run_var, eps, w_conv1, b_conv1 = torch_like
    y = lax.conv_general_dilated(
        x_nchw, w_conv3, window_strides=(1, 1), padding=[(1, 1), (1, 1)],
        dimension_numbers=('NCHW', 'OIHW', 'NCHW'))
    y = (y - run_mean[None, :, None, None]) / jnp.sqrt(run_var + eps)[None, :, None, None]
    y = y * gamma[None, :, None, None] + beta[None, :, None, None]
    y = jnp.maximum(y, 0.0)
    z = lax.conv_general_dilated(
        y, w_conv1, window_strides=(1, 1), padding=[(0, 0), (0, 0)],
        dimension_numbers=('NCHW', 'OIHW', 'NCHW'))
    z = z + b_conv1[None, :, None, None]
    return jax.nn.log_softmax(z, axis=1)


# --------------------------------------------------------------------------- #
# Test
# --------------------------------------------------------------------------- #
if __name__ == "__main__":
    # Small shapes consistent with the module: fc_dim=32 -> Cin=48, Cmid=8.
    N, fc_dim, num_class, H, W = 2, 32, 10, 16, 16
    cin = fc_dim // 2 * 3

    key = jax.random.PRNGKey(0)
    kx, kp = jax.random.split(key)
    x = jax.random.normal(kx, (N, cin, H, W), jnp.float32)
    kernel_params, torch_like = make_params(kp, fc_dim, num_class)

    # The PyTorch forward consumes conv_out[-1].
    conv_out = [x]
    ref = reference_forward(conv_out[-1], torch_like)

    # f32 path with a forced 2-tile spatial grid (exercises halo'd row tiling).
    out_f32 = c1_aggregation_forward(conv_out[-1], kernel_params,
                                     tile_h=8, compute_dtype=jnp.float32)
    out_f32 = jax.block_until_ready(out_f32)
    assert out_f32.shape == (N, num_class, H, W)
    assert float(jnp.max(jnp.abs(out_f32 - ref))) < 1e-3, "f32 mismatch vs reference"

    # bf16 path with VMEM-derived tile size (default, per perf feedback).
    out_bf16 = c1_aggregation_forward(conv_out[-1], kernel_params,
                                      compute_dtype=jnp.bfloat16)
    out_bf16 = jax.block_until_ready(out_bf16)
    assert out_bf16.shape == (N, num_class, H, W)
    # Tolerance loosened for bf16 MXU inputs (f32 accumulation).
    assert float(jnp.max(jnp.abs(out_bf16 - ref))) < 5e-2, "bf16 mismatch vs reference"

    print("KERNEL_OK")
</pallas_src>

<mosaic_0001>
module attributes {stable_mosaic.version = 11 : i64} {
  func.func @c1_agg_kernel(%arg0: i32, %arg1: i32, %arg2: memref<1x1x10x16x144xf32, #tpu.memory_space<vmem>>, %arg3: memref<3x144x8xf32, #tpu.memory_space<vmem>>, %arg4: memref<1x8xf32, #tpu.memory_space<vmem>>, %arg5: memref<8x10xf32, #tpu.memory_space<vmem>>, %arg6: memref<1x10xf32, #tpu.memory_space<vmem>>, %arg7: memref<1x10x128xf32, #tpu.memory_space<vmem>>) attributes {dimension_semantics = [#tpu.dimension_semantics<parallel>, #tpu.dimension_semantics<parallel>], iteration_bounds = array<i64: 2, 2>, scalar_prefetch = 0 : i64, scratch_operands = 0 : i64, tpu.core_type = #tpu.core_type<tc>, window_params = [{transform_indices = @transform_0, window_bounds = array<i64: 1, 1, 10, 16, 144>}, {pipeline_mode = #tpu.pipeline_mode<synchronous>, transform_indices = @transform_1, window_bounds = array<i64: 3, 144, 8>}, {pipeline_mode = #tpu.pipeline_mode<synchronous>, transform_indices = @transform_2, window_bounds = array<i64: 1, 8>}, {pipeline_mode = #tpu.pipeline_mode<synchronous>, transform_indices = @transform_3, window_bounds = array<i64: 8, 10>}, {pipeline_mode = #tpu.pipeline_mode<synchronous>, transform_indices = @transform_4, window_bounds = array<i64: 1, 10>}, {transform_indices = @transform_5, window_bounds = array<i64: 1, 10, 128>}]} {
    %cst = arith.constant 0.000000e+00 : f32
    %0 = vector.broadcast %cst : f32 to vector<128x8xf32>
    %c0 = arith.constant 0 : index
    %c0_0 = arith.constant 0 : index
    %c0_1 = arith.constant 0 : index
    %c0_2 = arith.constant 0 : index
    %c0_3 = arith.constant 0 : index
    %1 = vector.load %arg2[%c0, %c0_0, %c0_1, %c0_2, %c0_3] : memref<1x1x10x16x144xf32, #tpu.memory_space<vmem>>, vector<1x1x8x16x144xf32>
    %2 = vector.shape_cast %1 : vector<1x1x8x16x144xf32> to vector<8x16x144xf32>
    %3 = vector.shape_cast %2 : vector<8x16x144xf32> to vector<128x144xf32>
    %c0_4 = arith.constant 0 : index
    %c0_5 = arith.constant 0 : index
    %c0_6 = arith.constant 0 : index
    %4 = vector.load %arg3[%c0_4, %c0_5, %c0_6] : memref<3x144x8xf32, #tpu.memory_space<vmem>>, vector<1x144x8xf32>
    %5 = vector.shape_cast %4 : vector<1x144x8xf32> to vector<144x8xf32>
    %cst_7 = arith.constant dense<0.000000e+00> : vector<128x8xf32>
    %6 = tpu.matmul %3, %5, %cst_7 {dimension_numbers = #tpu.dot_dimension_numbers<[1], [0], [0], [1], [0, 0, 1, 1], [], []>} : vector<128x144xf32>, vector<144x8xf32>, vector<128x8xf32> -> vector<128x8xf32>
    %7 = arith.addf %0, %6 : vector<128x8xf32>
    %c0_8 = arith.constant 0 : index
    %c0_9 = arith.constant 0 : index
    %c1 = arith.constant 1 : index
    %c0_10 = arith.constant 0 : index
    %c0_11 = arith.constant 0 : index
    %8 = vector.load %arg2[%c0_8, %c0_9, %c1, %c0_10, %c0_11] : memref<1x1x10x16x144xf32, #tpu.memory_space<vmem>>, vector<1x1x8x16x144xf32>
    %9 = vector.shape_cast %8 : vector<1x1x8x16x144xf32> to vector<8x16x144xf32>
    %10 = vector.shape_cast %9 : vector<8x16x144xf32> to vector<128x144xf32>
    %c1_12 = arith.constant 1 : index
    %c0_13 = arith.constant 0 : index
    %c0_14 = arith.constant 0 : index
    %11 = vector.load %arg3[%c1_12, %c0_13, %c0_14] : memref<3x144x8xf32, #tpu.memory_space<vmem>>, vector<1x144x8xf32>
    %12 = vector.shape_cast %11 : vector<1x144x8xf32> to vector<144x8xf32>
    %cst_15 = arith.constant dense<0.000000e+00> : vector<128x8xf32>
    %13 = tpu.matmul %10, %12, %cst_15 {dimension_numbers = #tpu.dot_dimension_numbers<[1], [0], [0], [1], [0, 0, 1, 1], [], []>} : vector<128x144xf32>, vector<144x8xf32>, vector<128x8xf32> -> vector<128x8xf32>
    %14 = arith.addf %7, %13 : vector<128x8xf32>
    %c0_16 = arith.constant 0 : index
    %c0_17 = arith.constant 0 : index
    %c2 = arith.constant 2 : index
    %c0_18 = arith.constant 0 : index
    %c0_19 = arith.constant 0 : index
    %15 = vector.load %arg2[%c0_16, %c0_17, %c2, %c0_18, %c0_19] : memref<1x1x10x16x144xf32, #tpu.memory_space<vmem>>, vector<1x1x8x16x144xf32>
    %16 = vector.shape_cast %15 : vector<1x1x8x16x144xf32> to vector<8x16x144xf32>
    %17 = vector.shape_cast %16 : vector<8x16x144xf32> to vector<128x144xf32>
    %c2_20 = arith.constant 2 : index
    %c0_21 = arith.constant 0 : index
    %c0_22 = arith.constant 0 : index
    %18 = vector.load %arg3[%c2_20, %c0_21, %c0_22] : memref<3x144x8xf32, #tpu.memory_space<vmem>>, vector<1x144x8xf32>
    %19 = vector.shape_cast %18 : vector<1x144x8xf32> to vector<144x8xf32>
    %cst_23 = arith.constant dense<0.000000e+00> : vector<128x8xf32>
    %20 = tpu.matmul %17, %19, %cst_23 {dimension_numbers = #tpu.dot_dimension_numbers<[1], [0], [0], [1], [0, 0, 1, 1], [], []>} : vector<128x144xf32>, vector<144x8xf32>, vector<128x8xf32> -> vector<128x8xf32>
    %21 = arith.addf %14, %20 : vector<128x8xf32>
    %c0_24 = arith.constant 0 : index
    %c0_25 = arith.constant 0 : index
    %22 = vector.load %arg4[%c0_24, %c0_25] : memref<1x8xf32, #tpu.memory_space<vmem>>, vector<1x8xf32>
    %23 = vector.shape_cast %22 : vector<1x8xf32> to vector<8xf32>
    %24 = vector.shape_cast %23 : vector<8xf32> to vector<1x8xf32>
    %25 = vector.broadcast %24 : vector<1x8xf32> to vector<128x8xf32>
    %26 = arith.addf %21, %25 : vector<128x8xf32>
    %cst_26 = arith.constant 0.000000e+00 : f32
    %27 = vector.broadcast %cst_26 : f32 to vector<128x8xf32>
    %28 = arith.maximumf %26, %27 : vector<128x8xf32>
    %c0_27 = arith.constant 0 : index
    %c0_28 = arith.constant 0 : index
    %29 = vector.load %arg5[%c0_27, %c0_28] : memref<8x10xf32, #tpu.memory_space<vmem>>, vector<8x10xf32>
    %cst_29 = arith.constant dense<0.000000e+00> : vector<128x10xf32>
    %30 = tpu.matmul %28, %29, %cst_29 {dimension_numbers = #tpu.dot_dimension_numbers<[1], [0], [0], [1], [0, 0, 1, 1], [], []>} : vector<128x8xf32>, vector<8x10xf32>, vector<128x10xf32> -> vector<128x10xf32>
    %c0_30 = arith.constant 0 : index
    %c0_31 = arith.constant 0 : index
    %31 = vector.load %arg6[%c0_30, %c0_31] : memref<1x10xf32, #tpu.memory_space<vmem>>, vector<1x10xf32>
    %32 = vector.shape_cast %31 : vector<1x10xf32> to vector<10xf32>
    %33 = vector.shape_cast %32 : vector<10xf32> to vector<1x10xf32>
    %34 = vector.broadcast %33 : vector<1x10xf32> to vector<128x10xf32>
    %35 = arith.addf %30, %34 : vector<128x10xf32>
    %cst_32 = arith.constant dense<0xFF800000> : vector<128xf32>
    %36 = vector.multi_reduction <maximumf>, %35, %cst_32 [1] : vector<128x10xf32> to vector<128xf32>
    %37 = vector.shape_cast %36 : vector<128xf32> to vector<128x1xf32>
    %38 = vector.broadcast %37 : vector<128x1xf32> to vector<128x10xf32>
    %39 = arith.subf %35, %38 : vector<128x10xf32>
    %40 = math.exp %39 : vector<128x10xf32>
    %cst_33 = arith.constant dense<0.000000e+00> : vector<128xf32>
    %41 = vector.multi_reduction <add>, %40, %cst_33 [1] : vector<128x10xf32> to vector<128xf32>
    %42 = vector.shape_cast %41 : vector<128xf32> to vector<128x1xf32>
    %43 = math.log %42 : vector<128x1xf32>
    %44 = arith.addf %37, %43 : vector<128x1xf32>
    %45 = vector.broadcast %44 : vector<128x1xf32> to vector<128x10xf32>
    %46 = arith.subf %35, %45 : vector<128x10xf32>
    %47 = tpu.transpose %46, [1, 0] : vector<128x10xf32> -> vector<10x128xf32>
    %c0_34 = arith.constant 0 : index
    %c0_35 = arith.constant 0 : index
    %c0_36 = arith.constant 0 : index
    %48 = vector.load %arg7[%c0_34, %c0_35, %c0_36] : memref<1x10x128xf32, #tpu.memory_space<vmem>>, vector<1x10x128xf32>
    %49 = vector.shape_cast %48 : vector<1x10x128xf32> to vector<10x128xf32>
    %50 = vector.shape_cast %47 : vector<10x128xf32> to vector<1x10x128xf32>
    tpu.vector_store %arg7[%c0_34, %c0_35, %c0_36], %50 {strides = array<i32>} : memref<1x10x128xf32, #tpu.memory_space<vmem>>, vector<1x10x128xf32>,
    return
  }
  func.func @transform_0(%arg0: i32, %arg1: i32) -> (i32, i32, i32, i32, i32) {
    %c0_i32 = arith.constant 0 : i32
    %c0_i32_0 = arith.constant 0 : i32
    %c0_i32_1 = arith.constant 0 : i32
    %c0_i32_2 = arith.constant 0 : i32
    return %arg0, %arg1, %c0_i32, %c0_i32_0, %c0_i32_1 : i32, i32, i32, i32, i32
  }
  func.func @transform_1(%arg0: i32, %arg1: i32) -> (i32, i32, i32) {
    %c0_i32 = arith.constant 0 : i32
    %c0_i32_0 = arith.constant 0 : i32
    %c0_i32_1 = arith.constant 0 : i32
    %c0_i32_2 = arith.constant 0 : i32
    return %c0_i32, %c0_i32_0, %c0_i32_1 : i32, i32, i32
  }
  func.func @transform_2(%arg0: i32, %arg1: i32) -> (i32, i32) {
    %c0_i32 = arith.constant 0 : i32
    %c0_i32_0 = arith.constant 0 : i32
    %c0_i32_1 = arith.constant 0 : i32
    return %c0_i32, %c0_i32_0 : i32, i32
  }
  func.func @transform_3(%arg0: i32, %arg1: i32) -> (i32, i32) {
    %c0_i32 = arith.constant 0 : i32
    %c0_i32_0 = arith.constant 0 : i32
    %c0_i32_1 = arith.constant 0 : i32
    return %c0_i32, %c0_i32_0 : i32, i32
  }
  func.func @transform_4(%arg0: i32, %arg1: i32) -> (i32, i32) {
    %c0_i32 = arith.constant 0 : i32
    %c0_i32_0 = arith.constant 0 : i32
    %c0_i32_1 = arith.constant 0 : i32
    return %c0_i32, %c0_i32_0 : i32, i32
  }
  func.func @transform_5(%arg0: i32, %arg1: i32) -> (i32, i32, i32) {
    %c0_i32 = arith.constant 0 : i32
    %c0_i32_0 = arith.constant 0 : i32
    return %arg0, %c0_i32, %arg1 : i32, i32, i32
  }
}

</mosaic_0001>

<llo_original>
// kernel: c1_aggregation_forward.1
$region0: #{c1_aggregation_forward.1}
  #allocation0 [shape = 'u32[]', space=smem, size = 0x4, offset = 0x4, fixed_abs, tag = 'smem constant byte address 0x4 - core index']
  #allocation1 [shape = 'u32[72,128]{1,0:T(1,128)}', space=vmem, size = 0x9000, scoped, tag = 'internal scratch']
  %s0 = inlined_call_operand.vmem [shape: f32[2,2,10,16,144], index: 0, kind: input, shape index: {}]
  %s1 = inlined_call_operand.vmem [shape: f32[3,144,8], index: 1, kind: input, shape index: {}]
  %s2 = inlined_call_operand.vmem [shape: f32[1,8], index: 2, kind: input, shape index: {}]
  %s3 = inlined_call_operand.vmem [shape: f32[8,10], index: 3, kind: input, shape index: {}]
  %s4 = inlined_call_operand.vmem [shape: f32[1,10], index: 4, kind: input, shape index: {}]
  %s5 = inlined_call_operand.vmem [shape: f32[2,10,256], index: 5, kind: output, shape index: {}]
  %s6 = sld [smem:[#allocation0]]
  $region87: #{c1_aggregation_forward.1} parent=0
    _
  %s8 = ssub.s32 1, %s6
  %s9 = scalar_select 0, %s8, %s6
  $region1: #{c1_aggregation_forward.1} parent=0
    #allocation2 [shape = 'u8[16384]{0}', space=vmem, size = 0x4000, scoped, tag = 'output window, operand 0']
    loop: start=0, step=1, limit=6
    $region2: #{c1_aggregation_forward.1} parent=1 // loop_pre_header
      _
    $region3: #{c1_aggregation_forward.1} parent=1 // loop_header
      %s11 = sphi 0, %s15
      %p12 = scmp.ge.s32.totalorder %s11, 6
      %s18 = sphi 0, %s30
      %s19 = sphi 0, %s26
      %s20 = sphi 0, %s18
      %s21 = sphi 0, %s19
      %s22 = sphi 0, %s20
      %s23 = sphi 0, %s21
      %s35 = sphi 0, %s37
      %s38 = sphi 0, %s35
      %s39 = sphi 0, %s38
      %s55 = sphi 0, %s39
      %s59 = sphi 0, %s59
      %s61 = sphi 0, %s59
      %s62 = sphi 0, %s61
      %s76 = sphi 0, %s62
      %s80 = sphi 0, %s80
      %s82 = sphi 0, %s80
      %s83 = sphi 0, %s82
      %s97 = sphi 0, %s83
      %s101 = sphi 0, %s101
      %s103 = sphi 0, %s101
      %s104 = sphi 0, %s103
      %s118 = sphi 0, %s104
      %s122 = sphi 0, %s122
      %s124 = sphi 0, %s122
      %s125 = sphi 0, %s124
      %s139 = sphi 0, %s125
      %s147 = sphi 0, %s149
      %s150 = sphi 0, %s147
      %s151 = sphi 0, %s150
      %s167 = sphi 0, %s151
    $region4: #{c1_aggregation_forward.1} parent=1 // loop_header_branch
      %14 = sbr.rel (%p12) target = $region8
    $region5: #{c1_aggregation_forward.1} parent=1 // loop_body
      %s16 = ssub.s32 %s11, 1
      %s17 = ssub.s32 %s11, 2
      %s24 = sadd.s32 1, %s19
      %p25 = scmp.ge.s32.totalorder %s24, 2
      %s26 = scalar_select %p25, 0, %s24
      %s27 = sadd.s32 1, %s18
      %s28 = scalar_select %p25, %s27, %s18
      %p29 = scmp.ge.s32.totalorder %s28, 2
      %s30 = scalar_select %p29, 0, %s28
      %s31 = ssub.s32 %s18, %s30
      %s32 = ssub.s32 %s19, %s26
      %s33 = sor.u32 %s31, %s32
      %p34 = scmp.eq.s32.totalorder %s33, 0
      %s36 = sadd.s32 %s35, 1
      %s37 = scalar_select %p34, %s35, %s36
      %p40 = pneg %p34
      %p41 = scmp.eq.s32.totalorder %s11, 3
      %p42 = por %p40, %p41
      %p43 = scmp.ne.s32.totalorder %s35, %s38
      %p44 = scmp.eq.s32.totalorder %s11, 0
      %p45 = por %p43, %p44
      %p46 = scmp.ne.s32.totalorder %s35, %s38
      %p47 = scmp.eq.s32.totalorder %s16, 3
      %p48 = por %p46, %p47
      %p49 = scmp.ne.s32.totalorder %s38, %s39
      %p50 = scmp.eq.s32.totalorder %s16, 0
      %p51 = por %p49, %p50
      %p52 = scmp.ne.s32.totalorder %s38, %s39
      %p53 = scmp.eq.s32.totalorder %s17, 3
      %p54 = por %p52, %p53
      %p56 = scmp.ne.s32.totalorder %s39, %s55
      %p57 = scmp.eq.s32.totalorder %s17, 0
      %p58 = por %p56, %p57
      %s60 = sadd.s32 %s59, 1
      %p63 = scmp.eq.s32.totalorder %s11, 3
      %p64 = scmp.ne.s32.totalorder %s59, %s61
      %p65 = scmp.eq.s32.totalorder %s11, 0
      %p66 = por %p64, %p65
      %p67 = scmp.ne.s32.totalorder %s59, %s61
      %p68 = scmp.eq.s32.totalorder %s16, 3
      %p69 = por %p67, %p68
      %p70 = scmp.ne.s32.totalorder %s61, %s62
      %p71 = scmp.eq.s32.totalorder %s16, 0
      %p72 = por %p70, %p71
      %p73 = scmp.ne.s32.totalorder %s61, %s62
      %p74 = scmp.eq.s32.totalorder %s17, 3
      %p75 = por %p73, %p74
      %p77 = scmp.ne.s32.totalorder %s62, %s76
      %p78 = scmp.eq.s32.totalorder %s17, 0
      %p79 = por %p77, %p78
      %s81 = sadd.s32 %s80, 1
      %p84 = scmp.eq.s32.totalorder %s11, 3
      %p85 = scmp.ne.s32.totalorder %s80, %s82
      %p86 = scmp.eq.s32.totalorder %s11, 0
      %p87 = por %p85, %p86
      %p88 = scmp.ne.s32.totalorder %s80, %s82
      %p89 = scmp.eq.s32.totalorder %s16, 3
      %p90 = por %p88, %p89
      %p91 = scmp.ne.s32.totalorder %s82, %s83
      %p92 = scmp.eq.s32.totalorder %s16, 0
      %p93 = por %p91, %p92
      %p94 = scmp.ne.s32.totalorder %s82, %s83
      %p95 = scmp.eq.s32.totalorder %s17, 3
      %p96 = por %p94, %p95
      %p98 = scmp.ne.s32.totalorder %s83, %s97
      %p99 = scmp.eq.s32.totalorder %s17, 0
      %p100 = por %p98, %p99
      %s102 = sadd.s32 %s101, 1
      %p105 = scmp.eq.s32.totalorder %s11, 3
      %p106 = scmp.ne.s32.totalorder %s101, %s103
      %p107 = scmp.eq.s32.totalorder %s11, 0
      %p108 = por %p106, %p107
      %p109 = scmp.ne.s32.totalorder %s101, %s103
      %p110 = scmp.eq.s32.totalorder %s16, 3
      %p111 = por %p109, %p110
      %p112 = scmp.ne.s32.totalorder %s103, %s104
      %p113 = scmp.eq.s32.totalorder %s16, 0
      %p114 = por %p112, %p113
      %p115 = scmp.ne.s32.totalorder %s103, %s104
      %p116 = scmp.eq.s32.totalorder %s17, 3
      %p117 = por %p115, %p116
      %p119 = scmp.ne.s32.totalorder %s104, %s118
      %p120 = scmp.eq.s32.totalorder %s17, 0
      %p121 = por %p119, %p120
      %s123 = sadd.s32 %s122, 1
      %p126 = scmp.eq.s32.totalorder %s11, 3
      %p127 = scmp.ne.s32.totalorder %s122, %s124
      %p128 = scmp.eq.s32.totalorder %s11, 0
      %p129 = por %p127, %p128
      %p130 = scmp.ne.s32.totalorder %s122, %s124
      %p131 = scmp.eq.s32.totalorder %s16, 3
      %p132 = por %p130, %p131
      %p133 = scmp.ne.s32.totalorder %s124, %s125
      %p134 = scmp.eq.s32.totalorder %s16, 0
      %p135 = por %p133, %p134
      %p136 = scmp.ne.s32.totalorder %s124, %s125
      %p137 = scmp.eq.s32.totalorder %s17, 3
      %p138 = por %p136, %p137
      %p140 = scmp.ne.s32.totalorder %s125, %s139
      %p141 = scmp.eq.s32.totalorder %s17, 0
      %p142 = por %p140, %p141
      %s143 = ssub.s32 %s18, %s30
      %s144 = ssub.s32 %s19, %s26
      %s145 = sor.u32 %s143, %s144
      %p146 = scmp.eq.s32.totalorder %s145, 0
      %s148 = sadd.s32 %s147, 1
      %s149 = scalar_select %p146, %s147, %s148
      %p152 = pneg %p146
      %p153 = scmp.eq.s32.totalorder %s11, 3
      %p154 = por %p152, %p153
      %p155 = scmp.ne.s32.totalorder %s147, %s150
      %p156 = scmp.eq.s32.totalorder %s11, 0
      %p157 = por %p155, %p156
      %p158 = scmp.ne.s32.totalorder %s147, %s150
      %p159 = scmp.eq.s32.totalorder %s16, 3
      %p160 = por %p158, %p159
      %p161 = scmp.ne.s32.totalorder %s150, %s151
      %p162 = scmp.eq.s32.totalorder %s16, 0
      %p163 = por %p161, %p162
      %p164 = scmp.ne.s32.totalorder %s150, %s151
      %p165 = scmp.eq.s32.totalorder %s17, 3
      %p166 = por %p164, %p165
      %p168 = scmp.ne.s32.totalorder %s151, %s167
      %p169 = scmp.eq.s32.totalorder %s17, 0
      %p170 = por %p168, %p169
      %p171 = scmp.le.s32.totalorder 1, %s11
      %p172 = scmp.lt.s32.totalorder %s11, 5
      %p173 = pnand %p171, %p172
      %p174 = pneg %p173
      // Predicated region
      $region9: #{c1_aggregation_forward.1} parent=5 // pred_check
        _
      $region10: #{c1_aggregation_forward.1} parent=5 // pred_check_branch
        %176 = sbr.rel (%p173) target = $region12
      $region11: #{c1_aggregation_forward.1} parent=5 // pred_region
        %s177 = ssub.s32 %s11, 1
        // Predicated region
        $region13: #{c1_aggregation_forward.1} parent=11 // pred_check
          %p178 = pneg %p72
        $region14: #{c1_aggregation_forward.1} parent=11 // pred_check_branch
          %180 = sbr.rel (%p178) target = $region16
        $region15: #{c1_aggregation_forward.1} parent=11 // pred_region
          _
        $region16: #{c1_aggregation_forward.1} parent=11 // pred_fallthru
          _
        // Predicated region
        $region17: #{c1_aggregation_forward.1} parent=11 // pred_check
          %p181 = pneg %p93
        $region18: #{c1_aggregation_forward.1} parent=11 // pred_check_branch
          %183 = sbr.rel (%p181) target = $region20
        $region19: #{c1_aggregation_forward.1} parent=11 // pred_region
          _
        $region20: #{c1_aggregation_forward.1} parent=11 // pred_fallthru
          _
        // Predicated region
        $region21: #{c1_aggregation_forward.1} parent=11 // pred_check
          %p184 = pneg %p114
        $region22: #{c1_aggregation_forward.1} parent=11 // pred_check_branch
          %186 = sbr.rel (%p184) target = $region24
        $region23: #{c1_aggregation_forward.1} parent=11 // pred_region
          _
        $region24: #{c1_aggregation_forward.1} parent=11 // pred_fallthru
          _
        // Predicated region
        $region25: #{c1_aggregation_forward.1} parent=11 // pred_check
          %p187 = pneg %p135
        $region26: #{c1_aggregation_forward.1} parent=11 // pred_check_branch
          %189 = sbr.rel (%p187) target = $region28
        $region27: #{c1_aggregation_forward.1} parent=11 // pred_region
          _
        $region28: #{c1_aggregation_forward.1} parent=11 // pred_fallthru
          _
      $region12: #{c1_aggregation_forward.1} parent=5 // pred_fallthru
        _
      %p190 = scmp.lt.s32.totalorder %s11, 4
      // Predicated region
      $region29: #{c1_aggregation_forward.1} parent=5 // pred_check
        %p191 = pneg %p190
      $region30: #{c1_aggregation_forward.1} parent=5 // pred_check_branch
        %193 = sbr.rel (%p191) target = $region32
      $region31: #{c1_aggregation_forward.1} parent=5 // pred_region
        // Predicated region
        $region33: #{c1_aggregation_forward.1} parent=31 // pred_check
          %p194 = pneg %p45
        $region34: #{c1_aggregation_forward.1} parent=31 // pred_check_branch
          %196 = sbr.rel (%p194) target = $region36
        $region35: #{c1_aggregation_forward.1} parent=31 // pred_region
          %p197 = scmp.lt.s32.totalorder %s18, 1
          %s198 = scalar_select %p197, %s18, 1
          %p199 = scmp.lt.s32.totalorder %s19, 1
          %s200 = scalar_select %p199, %s19, 1
          %s201 = smul.addr %s200, 40
          %s202 = smul.addr %s198, 80
          %s203 = sadd.s32 %s201, %s202
          %s204 = smul.addr %s203, 8
          %s205 = scalar_lea.vmem %s0, %s204
        $region36: #{c1_aggregation_forward.1} parent=31 // pred_fallthru
          _
      $region32: #{c1_aggregation_forward.1} parent=5 // pred_fallthru
        _
      %p206 = scmp.le.s32.totalorder 1, %s11
      %p207 = scmp.lt.s32.totalorder %s11, 5
      %p208 = pnand %p206, %p207
      %p209 = pneg %p208
      // Predicated region
      $region37: #{c1_aggregation_forward.1} parent=5 // pred_check
        _
      $region38: #{c1_aggregation_forward.1} parent=5 // pred_check_branch
        %211 = sbr.rel (%p208) target = $region40
      $region39: #{c1_aggregation_forward.1} parent=5 // pred_region
        %s212 = ssub.s32 %s11, 1
        %p213 = scmp.lt.s32.totalorder %s20, 1
        %s214 = scalar_select %p213, %s20, 1
        %p215 = scmp.lt.s32.totalorder %s21, 1
        %s216 = scalar_select %p215, %s21, 1
        %s217 = smul.addr %s216, 40
        %s218 = smul.addr %s214, 80
        %s219 = sadd.s32 %s217, %s218
        %s220 = smul.addr %s219, 8
        %s221 = scalar_lea.vmem %s0, %s220
        %p222 = pneg %p51
        %p223 = pneg %p48
        %p224 = pneg %p72
        %p225 = pneg %p69
        %p226 = pneg %p93
        %p227 = pneg %p90
        %p228 = pneg %p114
        %p229 = pneg %p111
        %p230 = pneg %p135
        %p231 = pneg %p132
        %p232 = pneg %p163
        %p233 = pneg %p160
        %s234 = sand.u32 %s150, 1
        %s235 = sand.u32 %s150, 1
        %s236 = smul.addr %s235, 16
        %s237 = scalar_lea.vmem [#allocation2], %s236
        %p238 = scmp.lt.s32.totalorder %s20, 1
        %s239 = scalar_select %p238, %s20, 1
        %p240 = scmp.lt.s32.totalorder %s21, 1
        %s241 = scalar_select %p240, %s21, 1
        %s242 = smul.addr %s241, 40
        %s243 = smul.addr %s239, 80
        %s244 = sadd.s32 %s242, %s243
        %s245 = smul.addr %s244, 8
        %s246 = scalar_lea.vmem %s0, %s245
        %v247 = vld [vmem:[%s246] sm:$0xff]
        %v248 = vld [vmem:[%s246 + $0x8] sm:$0xff]
        %v249 = vld [vmem:[%s246 + $0x10] sm:$0xff]
        %v250 = vld [vmem:[%s246 + $0x18] sm:$0xff]
        %v251 = vld [vmem:[%s246 + $0x20] sm:$0xff]
        %v252 = vld [vmem:[%s246 + $0x28] sm:$0xff]
        %v253 = vld [vmem:[%s246 + $0x30] sm:$0xff]
        %v254 = vld [vmem:[%s246 + $0x38] sm:$0xff]
        %v255 = vld [vmem:[%s246 + $0x40] sm:$0xff]
        %v256 = vld [vmem:[%s246 + $0x48] sm:$0xff]
        %v257 = vld [vmem:[%s246 + $0x50] sm:$0xff]
        %v258 = vld [vmem:[%s246 + $0x58] sm:$0xff]
        %v259 = vld [vmem:[%s246 + $0x60] sm:$0xff]
        %v260 = vld [vmem:[%s246 + $0x68] sm:$0xff]
        %v261 = vld [vmem:[%s246 + $0x70] sm:$0xff]
        %v262 = vld [vmem:[%s246 + $0x78] sm:$0xff]
        %v263 = vld [vmem:[%s246 + $0x80] sm:$0xff]
        %v264 = vld [vmem:[%s246 + $0x88] sm:$0xff]
        %v265 = vld [vmem:[%s246 + $0x90] sm:$0xff]
        %v266 = vld [vmem:[%s246 + $0x98] sm:$0xff]
        %v267 = vld [vmem:[%s246 + $0xa0] sm:$0xff]
        %v268 = vld [vmem:[%s246 + $0xa8] sm:$0xff]
        %v269 = vld [vmem:[%s246 + $0xb0] sm:$0xff]
        %v270 = vld [vmem:[%s246 + $0xb8] sm:$0xff]
        %v271 = vld [vmem:[%s246 + $0xc0] sm:$0xff]
        %v272 = vld [vmem:[%s246 + $0xc8] sm:$0xff]
        %v273 = vld [vmem:[%s246 + $0xd0] sm:$0xff]
        %v274 = vld [vmem:[%s246 + $0xd8] sm:$0xff]
        %v275 = vld [vmem:[%s246 + $0xe0] sm:$0xff]
        %v276 = vld [vmem:[%s246 + $0xe8] sm:$0xff]
        %v277 = vld [vmem:[%s246 + $0xf0] sm:$0xff]
        %v278 = vld [vmem:[%s246 + $0xf8] sm:$0xff]
        %v279 = vld [vmem:[%s1] sm:$0xff]
        %v280 = vld [vmem:[%s1 + $0x8] sm:$0xff]
        %v281 = vld [vmem:[%s1 + $0x10] sm:$0xff]
        %v282 = vld [vmem:[%s1 + $0x18] sm:$0xff]
        %v283 = vld [vmem:[%s1 + $0x20] sm:$0xff]
        %v284 = vld [vmem:[%s1 + $0x28] sm:$0xff]
        %v285 = vld [vmem:[%s1 + $0x30] sm:$0xff]
        %v286 = vld [vmem:[%s1 + $0x38] sm:$0xff]
        %v287 = vld [vmem:[%s1 + $0x40] sm:$0xff]
        %v288 = vld [vmem:[%s1 + $0x48] sm:$0xff]
        %v289 = vld [vmem:[%s1 + $0x50] sm:$0xff]
        %v290 = vld [vmem:[%s1 + $0x58] sm:$0xff]
        %v291 = vld [vmem:[%s1 + $0x60] sm:$0xff]
        %v292 = vld [vmem:[%s1 + $0x68] sm:$0xff]
        %v293 = vld [vmem:[%s1 + $0x70] sm:$0xff]
        %v294 = vld [vmem:[%s1 + $0x78] sm:$0xff]
        %v295 = vld [vmem:[%s1 + $0x80] sm:$0xff]
        %v296 = vld [vmem:[%s1 + $0x88] sm:$0xff]
        %s297 = scalar_lea.vmem %s246, 32
        %v298 = vld [vmem:[%s297] sm:$0xff]
        %v299 = vld [vmem:[%s297 + $0x8] sm:$0xff]
        %v300 = vld [vmem:[%s297 + $0x10] sm:$0xff]
        %v301 = vld [vmem:[%s297 + $0x18] sm:$0xff]
        %v302 = vld [vmem:[%s297 + $0x20] sm:$0xff]
        %v303 = vld [vmem:[%s297 + $0x28] sm:$0xff]
        %v304 = vld [vmem:[%s297 + $0x30] sm:$0xff]
        %v305 = vld [vmem:[%s297 + $0x38] sm:$0xff]
        %v306 = vld [vmem:[%s297 + $0x40] sm:$0xff]
        %v307 = vld [vmem:[%s297 + $0x48] sm:$0xff]
        %v308 = vld [vmem:[%s297 + $0x50] sm:$0xff]
        %v309 = vld [vmem:[%s297 + $0x58] sm:$0xff]
        %v310 = vld [vmem:[%s297 + $0x60] sm:$0xff]
        %v311 = vld [vmem:[%s297 + $0x68] sm:$0xff]
        %v312 = vld [vmem:[%s297 + $0x70] sm:$0xff]
        %v313 = vld [vmem:[%s297 + $0x78] sm:$0xff]
        %v314 = vld [vmem:[%s297 + $0x80] sm:$0xff]
        %v315 = vld [vmem:[%s297 + $0x88] sm:$0xff]
        %v316 = vld [vmem:[%s297 + $0x90] sm:$0xff]
        %v317 = vld [vmem:[%s297 + $0x98] sm:$0xff]
        %v318 = vld [vmem:[%s297 + $0xa0] sm:$0xff]
        %v319 = vld [vmem:[%s297 + $0xa8] sm:$0xff]
        %v320 = vld [vmem:[%s297 + $0xb0] sm:$0xff]
        %v321 = vld [vmem:[%s297 + $0xb8] sm:$0xff]
        %v322 = vld [vmem:[%s297 + $0xc0] sm:$0xff]
        %v323 = vld [vmem:[%s297 + $0xc8] sm:$0xff]
        %v324 = vld [vmem:[%s297 + $0xd0] sm:$0xff]
        %v325 = vld [vmem:[%s297 + $0xd8] sm:$0xff]
        %v326 = vld [vmem:[%s297 + $0xe0] sm:$0xff]
        %v327 = vld [vmem:[%s297 + $0xe8] sm:$0xff]
        %v328 = vld [vmem:[%s297 + $0xf0] sm:$0xff]
        %v329 = vld [vmem:[%s297 + $0xf8] sm:$0xff]
        %s330 = scalar_lea.vmem %s1, 144
        %v331 = vld [vmem:[%s330] sm:$0xff]
        %v332 = vld [vmem:[%s330 + $0x8] sm:$0xff]
        %v333 = vld [vmem:[%s330 + $0x10] sm:$0xff]
        %v334 = vld [vmem:[%s330 + $0x18] sm:$0xff]
        %v335 = vld [vmem:[%s330 + $0x20] sm:$0xff]
        %v336 = vld [vmem:[%s330 + $0x28] sm:$0xff]
        %v337 = vld [vmem:[%s330 + $0x30] sm:$0xff]
        %v338 = vld [vmem:[%s330 + $0x38] sm:$0xff]
        %v339 = vld [vmem:[%s330 + $0x40] sm:$0xff]
        %v340 = vld [vmem:[%s330 + $0x48] sm:$0xff]
        %v341 = vld [vmem:[%s330 + $0x50] sm:$0xff]
        %v342 = vld [vmem:[%s330 + $0x58] sm:$0xff]
        %v343 = vld [vmem:[%s330 + $0x60] sm:$0xff]
        %v344 = vld [vmem:[%s330 + $0x68] sm:$0xff]
        %v345 = vld [vmem:[%s330 + $0x70] sm:$0xff]
        %v346 = vld [vmem:[%s330 + $0x78] sm:$0xff]
        %v347 = vld [vmem:[%s330 + $0x80] sm:$0xff]
        %v348 = vld [vmem:[%s330 + $0x88] sm:$0xff]
        %vm349 = vcmask 130048
        %v351 = vsel %vm349, %v299, 0
        %v354 = vsel %vm349, %v301, 0
        %v357 = vsel %vm349, %v303, 0
        %v360 = vsel %vm349, %v305, 0
        %v363 = vsel %vm349, %v307, 0
        %v366 = vsel %vm349, %v309, 0
        %v369 = vsel %vm349, %v311, 0
        %v372 = vsel %vm349, %v313, 0
        %v375 = vsel %vm349, %v315, 0
        %v378 = vsel %vm349, %v317, 0
        %v381 = vsel %vm349, %v319, 0
        %v384 = vsel %vm349, %v321, 0
        %v387 = vsel %vm349, %v323, 0
        %v390 = vsel %vm349, %v325, 0
        %v393 = vsel %vm349, %v327, 0
        %v396 = vsel %vm349, %v329, 0
        %398 = vmatpush.msra.mxu0 %v346
        %399 = vmatpush.msra.mxu0 %v345
        %400 = vmatpush.msra.mxu0 %v344
        %401 = vmatpush.msra.mxu0 %v343
        %402 = vmatpush.msra.mxu0 %v342
        %403 = vmatpush.msra.mxu0 %v341
        %404 = vmatpush.msra.mxu0 %v340
        %405 = vmatpush.msra.mxu0 %v339
        %406 = vmatpush.msra.mxu0 %v338
        %407 = vmatpush.msra.mxu0 %v337
        %408 = vmatpush.msra.mxu0 %v336
        %409 = vmatpush.msra.mxu0 %v335
        %410 = vmatpush.msra.mxu0 %v334
        %411 = vmatpush.msra.mxu0 %v333
        %412 = vmatpush.msra.mxu0 %v332
        %413 = vmatpush.msra.mxu0 %v331
        %414 = vmatmul.f32.gmra.mxu0 %v298
        %v415 = vpop.f32.mrf.mxu0
        %v416 = vadd.f32 0.0, %v415
        %417 = vmatmul.f32.gmra.mxu0 %v300
        %v418 = vpop.f32.mrf.mxu0
        %v419 = vadd.f32 0.0, %v418
        %420 = vmatmul.f32.gmra.mxu0 %v302
        %v421 = vpop.f32.mrf.mxu0
        %v422 = vadd.f32 0.0, %v421
        %423 = vmatmul.f32.gmra.mxu0 %v304
        %v424 = vpop.f32.mrf.mxu0
        %v425 = vadd.f32 0.0, %v424
        %426 = vmatmul.f32.gmra.mxu0 %v306
        %v427 = vpop.f32.mrf.mxu0
        %v428 = vadd.f32 0.0, %v427
        %429 = vmatmul.f32.gmra.mxu0 %v308
        %v430 = vpop.f32.mrf.mxu0
        %v431 = vadd.f32 0.0, %v430
        %432 = vmatmul.f32.gmra.mxu0 %v310
        %v433 = vpop.f32.mrf.mxu0
        %v434 = vadd.f32 0.0, %v433
        %435 = vmatmul.f32.gmra.mxu0 %v312
        %v436 = vpop.f32.mrf.mxu0
        %v437 = vadd.f32 0.0, %v436
        %438 = vmatmul.f32.gmra.mxu0 %v314
        %v439 = vpop.f32.mrf.mxu0
        %v440 = vadd.f32 0.0, %v439
        %441 = vmatmul.f32.gmra.mxu0 %v316
        %v442 = vpop.f32.mrf.mxu0
        %v443 = vadd.f32 0.0, %v442
        %444 = vmatmul.f32.gmra.mxu0 %v318
        %v445 = vpop.f32.mrf.mxu0
        %v446 = vadd.f32 0.0, %v445
        %447 = vmatmul.f32.gmra.mxu0 %v320
        %v448 = vpop.f32.mrf.mxu0
        %v449 = vadd.f32 0.0, %v448
        %450 = vmatmul.f32.gmra.mxu0 %v322
        %v451 = vpop.f32.mrf.mxu0
        %v452 = vadd.f32 0.0, %v451
        %453 = vmatmul.f32.gmra.mxu0 %v324
        %v454 = vpop.f32.mrf.mxu0
        %v455 = vadd.f32 0.0, %v454
        %456 = vmatmul.f32.gmra.mxu0 %v326
        %v457 = vpop.f32.mrf.mxu0
        %v458 = vadd.f32 0.0, %v457
        %459 = vmatmul.f32.gmra.mxu0 %v328
        %v460 = vpop.f32.mrf.mxu0
        %v461 = vadd.f32 0.0, %v460
        %462 = vdwg.mxu0
        %463 = vmatpush.msra.mxu0 0.0
        %464 = vmatpush.msra.mxu0 0.0
        %465 = vmatpush.msra.mxu0 0.0
        %466 = vmatpush.msra.mxu0 0.0
        %467 = vmatpush.msra.mxu0 0.0
        %468 = vmatpush.msra.mxu0 0.0
        %469 = vmatpush.msra.mxu0 0.0
        %470 = vmatpush.msra.mxu0 0.0
        %471 = vmatpush.msra.mxu0 0.0
        %472 = vmatpush.msra.mxu0 0.0
        %473 = vmatpush.msra.mxu0 0.0
        %474 = vmatpush.msra.mxu0 0.0
        %475 = vmatpush.msra.mxu0 0.0
        %476 = vmatpush.msra.mxu0 0.0
        %477 = vmatpush.msra.mxu0 %v348
        %478 = vmatpush.msra.mxu0 %v347
        %479 = vmatmul.f32.gmra.mxu0 %v351
        %v480 = vpop.f32.mrf.mxu0
        %v481 = vadd.f32 %v416, %v480
        %482 = vmatmul.f32.gmra.mxu0 %v354
        %v483 = vpop.f32.mrf.mxu0
        %v484 = vadd.f32 %v419, %v483
        %485 = vmatmul.f32.gmra.mxu0 %v357
        %v486 = vpop.f32.mrf.mxu0
        %v487 = vadd.f32 %v422, %v486
        %488 = vmatmul.f32.gmra.mxu0 %v360
        %v489 = vpop.f32.mrf.mxu0
        %v490 = vadd.f32 %v425, %v489
        %491 = vmatmul.f32.gmra.mxu0 %v363
        %v492 = vpop.f32.mrf.mxu0
        %v493 = vadd.f32 %v428, %v492
        %494 = vmatmul.f32.gmra.mxu0 %v366
        %v495 = vpop.f32.mrf.mxu0
        %v496 = vadd.f32 %v431, %v495
        %497 = vmatmul.f32.gmra.mxu0 %v369
        %v498 = vpop.f32.mrf.mxu0
        %v499 = vadd.f32 %v434, %v498
        %500 = vmatmul.f32.gmra.mxu0 %v372
        %v501 = vpop.f32.mrf.mxu0
        %v502 = vadd.f32 %v437, %v501
        %503 = vmatmul.f32.gmra.mxu0 %v375
        %v504 = vpop.f32.mrf.mxu0
        %v505 = vadd.f32 %v440, %v504
        %506 = vmatmul.f32.gmra.mxu0 %v378
        %v507 = vpop.f32.mrf.mxu0
        %v508 = vadd.f32 %v443, %v507
        %509 = vmatmul.f32.gmra.mxu0 %v381
        %v510 = vpop.f32.mrf.mxu0
        %v511 = vadd.f32 %v446, %v510
        %512 = vmatmul.f32.gmra.mxu0 %v384
        %v513 = vpop.f32.mrf.mxu0
        %v514 = vadd.f32 %v449, %v513
        %515 = vmatmul.f32.gmra.mxu0 %v387
        %v516 = vpop.f32.mrf.mxu0
        %v517 = vadd.f32 %v452, %v516
        %518 = vmatmul.f32.gmra.mxu0 %v390
        %v519 = vpop.f32.mrf.mxu0
        %v520 = vadd.f32 %v455, %v519
        %521 = vmatmul.f32.gmra.mxu0 %v393
        %v522 = vpop.f32.mrf.mxu0
        %v523 = vadd.f32 %v458, %v522
        %524 = vmatmul.f32.gmra.mxu0 %v396
        %v525 = vpop.f32.mrf.mxu0
        %v526 = vadd.f32 %v461, %v525
        %527 = vdwg.mxu0
        %v529 = vsel %vm349, %v248, 0
        %v532 = vsel %vm349, %v250, 0
        %v535 = vsel %vm349, %v252, 0
        %v538 = vsel %vm349, %v254, 0
        %v541 = vsel %vm349, %v256, 0
        %v544 = vsel %vm349, %v258, 0
        %v547 = vsel %vm349, %v260, 0
        %v550 = vsel %vm349, %v262, 0
        %v553 = vsel %vm349, %v264, 0
        %v556 = vsel %vm349, %v266, 0
        %v559 = vsel %vm349, %v268, 0
        %v562 = vsel %vm349, %v270, 0
        %v565 = vsel %vm349, %v272, 0
        %v568 = vsel %vm349, %v274, 0
        %v571 = vsel %vm349, %v276, 0
        %v574 = vsel %vm349, %v278, 0
        %576 = vmatpush.msra.mxu0 %v294
        %577 = vmatpush.msra.mxu0 %v293
        %578 = vmatpush.msra.mxu0 %v292
        %579 = vmatpush.msra.mxu0 %v291
        %580 = vmatpush.msra.mxu0 %v290
        %581 = vmatpush.msra.mxu0 %v289
        %582 = vmatpush.msra.mxu0 %v288
        %583 = vmatpush.msra.mxu0 %v287
        %584 = vmatpush.msra.mxu0 %v286
        %585 = vmatpush.msra.mxu0 %v285
        %586 = vmatpush.msra.mxu0 %v284
        %587 = vmatpush.msra.mxu0 %v283
        %588 = vmatpush.msra.mxu0 %v282
        %589 = vmatpush.msra.mxu0 %v281
        %590 = vmatpush.msra.mxu0 %v280
        %591 = vmatpush.msra.mxu0 %v279
        %592 = vmatmul.f32.gmra.mxu0 %v247
        %v593 = vpop.f32.mrf.mxu0
        %v594 = vadd.f32 %v481, %v593
        %595 = vmatmul.f32.gmra.mxu0 %v249
        %v596 = vpop.f32.mrf.mxu0
        %v597 = vadd.f32 %v484, %v596
        %598 = vmatmul.f32.gmra.mxu0 %v251
        %v599 = vpop.f32.mrf.mxu0
        %v600 = vadd.f32 %v487, %v599
        %601 = vmatmul.f32.gmra.mxu0 %v253
        %v602 = vpop.f32.mrf.mxu0
        %v603 = vadd.f32 %v490, %v602
        %604 = vmatmul.f32.gmra.mxu0 %v255
        %v605 = vpop.f32.mrf.mxu0
        %v606 = vadd.f32 %v493, %v605
        %607 = vmatmul.f32.gmra.mxu0 %v257
        %v608 = vpop.f32.mrf.mxu0
        %v609 = vadd.f32 %v496, %v608
        %610 = vmatmul.f32.gmra.mxu0 %v259
        %v611 = vpop.f32.mrf.mxu0
        %v612 = vadd.f32 %v499, %v611
        %613 = vmatmul.f32.gmra.mxu0 %v261
        %v614 = vpop.f32.mrf.mxu0
        %v615 = vadd.f32 %v502, %v614
        %616 = vmatmul.f32.gmra.mxu0 %v263
        %v617 = vpop.f32.mrf.mxu0
        %v618 = vadd.f32 %v505, %v617
        %619 = vmatmul.f32.gmra.mxu0 %v265
        %v620 = vpop.f32.mrf.mxu0
        %v621 = vadd.f32 %v508, %v620
        %622 = vmatmul.f32.gmra.mxu0 %v267
        %v623 = vpop.f32.mrf.mxu0
        %v624 = vadd.f32 %v511, %v623
        %625 = vmatmul.f32.gmra.mxu0 %v269
        %v626 = vpop.f32.mrf.mxu0
        %v627 = vadd.f32 %v514, %v626
        %628 = vmatmul.f32.gmra.mxu0 %v271
        %v629 = vpop.f32.mrf.mxu0
        %v630 = vadd.f32 %v517, %v629
        %631 = vmatmul.f32.gmra.mxu0 %v273
        %v632 = vpop.f32.mrf.mxu0
        %v633 = vadd.f32 %v520, %v632
        %634 = vmatmul.f32.gmra.mxu0 %v275
        %v635 = vpop.f32.mrf.mxu0
        %v636 = vadd.f32 %v523, %v635
        %637 = vmatmul.f32.gmra.mxu0 %v277
        %v638 = vpop.f32.mrf.mxu0
        %v639 = vadd.f32 %v526, %v638
        %640 = vdwg.mxu0
        %641 = vmatpush.msra.mxu0 0.0
        %642 = vmatpush.msra.mxu0 0.0
        %643 = vmatpush.msra.mxu0 0.0
        %644 = vmatpush.msra.mxu0 0.0
        %645 = vmatpush.msra.mxu0 0.0
        %646 = vmatpush.msra.mxu0 0.0
        %647 = vmatpush.msra.mxu0 0.0
        %648 = vmatpush.msra.mxu0 0.0
        %649 = vmatpush.msra.mxu0 0.0
        %650 = vmatpush.msra.mxu0 0.0
        %651 = vmatpush.msra.mxu0 0.0
        %652 = vmatpush.msra.mxu0 0.0
        %653 = vmatpush.msra.mxu0 0.0
        %654 = vmatpush.msra.mxu0 0.0
        %655 = vmatpush.msra.mxu0 %v296
        %656 = vmatpush.msra.mxu0 %v295
        %657 = vmatmul.f32.gmra.mxu0 %v529
        %v658 = vpop.f32.mrf.mxu0
        %v659 = vadd.f32 %v594, %v658
        %660 = vmatmul.f32.gmra.mxu0 %v532
        %v661 = vpop.f32.mrf.mxu0
        %v662 = vadd.f32 %v597, %v661
        %663 = vmatmul.f32.gmra.mxu0 %v535
        %v664 = vpop.f32.mrf.mxu0
        %v665 = vadd.f32 %v600, %v664
        %666 = vmatmul.f32.gmra.mxu0 %v538
        %v667 = vpop.f32.mrf.mxu0
        %v668 = vadd.f32 %v603, %v667
        %669 = vmatmul.f32.gmra.mxu0 %v541
        %v670 = vpop.f32.mrf.mxu0
        %v671 = vadd.f32 %v606, %v670
        %672 = vmatmul.f32.gmra.mxu0 %v544
        %v673 = vpop.f32.mrf.mxu0
        %v674 = vadd.f32 %v609, %v673
        %675 = vmatmul.f32.gmra.mxu0 %v547
        %v676 = vpop.f32.mrf.mxu0
        %v677 = vadd.f32 %v612, %v676
        %678 = vmatmul.f32.gmra.mxu0 %v550
        %v679 = vpop.f32.mrf.mxu0
        %v680 = vadd.f32 %v615, %v679
        %681 = vmatmul.f32.gmra.mxu0 %v553
        %v682 = vpop.f32.mrf.mxu0
        %v683 = vadd.f32 %v618, %v682
        %684 = vmatmul.f32.gmra.mxu0 %v556
        %v685 = vpop.f32.mrf.mxu0
        %v686 = vadd.f32 %v621, %v685
        %687 = vmatmul.f32.gmra.mxu0 %v559
        %v688 = vpop.f32.mrf.mxu0
        %v689 = vadd.f32 %v624, %v688
        %690 = vmatmul.f32.gmra.mxu0 %v562
        %v691 = vpop.f32.mrf.mxu0
        %v692 = vadd.f32 %v627, %v691
        %693 = vmatmul.f32.gmra.mxu0 %v565
        %v694 = vpop.f32.mrf.mxu0
        %v695 = vadd.f32 %v630, %v694
        %696 = vmatmul.f32.gmra.mxu0 %v568
        %v697 = vpop.f32.mrf.mxu0
        %v698 = vadd.f32 %v633, %v697
        %699 = vmatmul.f32.gmra.mxu0 %v571
        %v700 = vpop.f32.mrf.mxu0
        %v701 = vadd.f32 %v636, %v700
        %702 = vmatmul.f32.gmra.mxu0 %v574
        %v703 = vpop.f32.mrf.mxu0
        %v704 = vadd.f32 %v639, %v703
        %705 = vdwg.mxu0
        %s706 = scalar_lea.vmem %s246, 64
        %v707 = vld [vmem:[%s706] sm:$0xff]
        %v708 = vld [vmem:[%s706 + $0x8] sm:$0xff]
        %v709 = vld [vmem:[%s706 + $0x10] sm:$0xff]
        %v710 = vld [vmem:[%s706 + $0x18] sm:$0xff]
        %v711 = vld [vmem:[%s706 + $0x20] sm:$0xff]
        %v712 = vld [vmem:[%s706 + $0x28] sm:$0xff]
        %v713 = vld [vmem:[%s706 + $0x30] sm:$0xff]
        %v714 = vld [vmem:[%s706 + $0x38] sm:$0xff]
        %v715 = vld [vmem:[%s706 + $0x40] sm:$0xff]
        %v716 = vld [vmem:[%s706 + $0x48] sm:$0xff]
        %v717 = vld [vmem:[%s706 + $0x50] sm:$0xff]
        %v718 = vld [vmem:[%s706 + $0x58] sm:$0xff]
        %v719 = vld [vmem:[%s706 + $0x60] sm:$0xff]
        %v720 = vld [vmem:[%s706 + $0x68] sm:$0xff]
        %v721 = vld [vmem:[%s706 + $0x70] sm:$0xff]
        %v722 = vld [vmem:[%s706 + $0x78] sm:$0xff]
        %v723 = vld [vmem:[%s706 + $0x80] sm:$0xff]
        %v724 = vld [vmem:[%s706 + $0x88] sm:$0xff]
        %v725 = vld [vmem:[%s706 + $0x90] sm:$0xff]
        %v726 = vld [vmem:[%s706 + $0x98] sm:$0xff]
        %v727 = vld [vmem:[%s706 + $0xa0] sm:$0xff]
        %v728 = vld [vmem:[%s706 + $0xa8] sm:$0xff]
        %v729 = vld [vmem:[%s706 + $0xb0] sm:$0xff]
        %v730 = vld [vmem:[%s706 + $0xb8] sm:$0xff]
        %v731 = vld [vmem:[%s706 + $0xc0] sm:$0xff]
        %v732 = vld [vmem:[%s706 + $0xc8] sm:$0xff]
        %v733 = vld [vmem:[%s706 + $0xd0] sm:$0xff]
        %v734 = vld [vmem:[%s706 + $0xd8] sm:$0xff]
        %v735 = vld [vmem:[%s706 + $0xe0] sm:$0xff]
        %v736 = vld [vmem:[%s706 + $0xe8] sm:$0xff]
        %v737 = vld [vmem:[%s706 + $0xf0] sm:$0xff]
        %v738 = vld [vmem:[%s706 + $0xf8] sm:$0xff]
        %s739 = scalar_lea.vmem %s1, 288
        %v740 = vld [vmem:[%s739] sm:$0xff]
        %v741 = vld [vmem:[%s739 + $0x8] sm:$0xff]
        %v742 = vld [vmem:[%s739 + $0x10] sm:$0xff]
        %v743 = vld [vmem:[%s739 + $0x18] sm:$0xff]
        %v744 = vld [vmem:[%s739 + $0x20] sm:$0xff]
        %v745 = vld [vmem:[%s739 + $0x28] sm:$0xff]
        %v746 = vld [vmem:[%s739 + $0x30] sm:$0xff]
        %v747 = vld [vmem:[%s739 + $0x38] sm:$0xff]
        %v748 = vld [vmem:[%s739 + $0x40] sm:$0xff]
        %v749 = vld [vmem:[%s739 + $0x48] sm:$0xff]
        %v750 = vld [vmem:[%s739 + $0x50] sm:$0xff]
        %v751 = vld [vmem:[%s739 + $0x58] sm:$0xff]
        %v752 = vld [vmem:[%s739 + $0x60] sm:$0xff]
        %v753 = vld [vmem:[%s739 + $0x68] sm:$0xff]
        %v754 = vld [vmem:[%s739 + $0x70] sm:$0xff]
        %v755 = vld [vmem:[%s739 + $0x78] sm:$0xff]
        %v756 = vld [vmem:[%s739 + $0x80] sm:$0xff]
        %v757 = vld [vmem:[%s739 + $0x88] sm:$0xff]
        %v759 = vsel %vm349, %v708, 0
        %v762 = vsel %vm349, %v710, 0
        %v765 = vsel %vm349, %v712, 0
        %v768 = vsel %vm349, %v714, 0
        %v771 = vsel %vm349, %v716, 0
        %v774 = vsel %vm349, %v718, 0
        %v777 = vsel %vm349, %v720, 0
        %v780 = vsel %vm349, %v722, 0
        %v783 = vsel %vm349, %v724, 0
        %v786 = vsel %vm349, %v726, 0
        %v789 = vsel %vm349, %v728, 0
        %v792 = vsel %vm349, %v730, 0
        %v795 = vsel %vm349, %v732, 0
        %v798 = vsel %vm349, %v734, 0
        %v801 = vsel %vm349, %v736, 0
        %v804 = vsel %vm349, %v738, 0
        %806 = vmatpush.msra.mxu0 %v755
        %807 = vmatpush.msra.mxu0 %v754
        %808 = vmatpush.msra.mxu0 %v753
        %809 = vmatpush.msra.mxu0 %v752
        %810 = vmatpush.msra.mxu0 %v751
        %811 = vmatpush.msra.mxu0 %v750
        %812 = vmatpush.msra.mxu0 %v749
        %813 = vmatpush.msra.mxu0 %v748
        %814 = vmatpush.msra.mxu0 %v747
        %815 = vmatpush.msra.mxu0 %v746
        %816 = vmatpush.msra.mxu0 %v745
        %817 = vmatpush.msra.mxu0 %v744
        %818 = vmatpush.msra.mxu0 %v743
        %819 = vmatpush.msra.mxu0 %v742
        %820 = vmatpush.msra.mxu0 %v741
        %821 = vmatpush.msra.mxu0 %v740
        %822 = vmatmul.f32.gmra.mxu0 %v707
        %v823 = vpop.f32.mrf.mxu0
        %v824 = vadd.f32 0.0, %v823
        %825 = vmatmul.f32.gmra.mxu0 %v709
        %v826 = vpop.f32.mrf.mxu0
        %v827 = vadd.f32 0.0, %v826
        %828 = vmatmul.f32.gmra.mxu0 %v711
        %v829 = vpop.f32.mrf.mxu0
        %v830 = vadd.f32 0.0, %v829
        %831 = vmatmul.f32.gmra.mxu0 %v713
        %v832 = vpop.f32.mrf.mxu0
        %v833 = vadd.f32 0.0, %v832
        %834 = vmatmul.f32.gmra.mxu0 %v715
        %v835 = vpop.f32.mrf.mxu0
        %v836 = vadd.f32 0.0, %v835
        %837 = vmatmul.f32.gmra.mxu0 %v717
        %v838 = vpop.f32.mrf.mxu0
        %v839 = vadd.f32 0.0, %v838
        %840 = vmatmul.f32.gmra.mxu0 %v719
        %v841 = vpop.f32.mrf.mxu0
        %v842 = vadd.f32 0.0, %v841
        %843 = vmatmul.f32.gmra.mxu0 %v721
        %v844 = vpop.f32.mrf.mxu0
        %v845 = vadd.f32 0.0, %v844
        %846 = vmatmul.f32.gmra.mxu0 %v723
        %v847 = vpop.f32.mrf.mxu0
        %v848 = vadd.f32 0.0, %v847
        %849 = vmatmul.f32.gmra.mxu0 %v725
        %v850 = vpop.f32.mrf.mxu0
        %v851 = vadd.f32 0.0, %v850
        %852 = vmatmul.f32.gmra.mxu0 %v727
        %v853 = vpop.f32.mrf.mxu0
        %v854 = vadd.f32 0.0, %v853
        %855 = vmatmul.f32.gmra.mxu0 %v729
        %v856 = vpop.f32.mrf.mxu0
        %v857 = vadd.f32 0.0, %v856
        %858 = vmatmul.f32.gmra.mxu0 %v731
        %v859 = vpop.f32.mrf.mxu0
        %v860 = vadd.f32 0.0, %v859
        %861 = vmatmul.f32.gmra.mxu0 %v733
        %v862 = vpop.f32.mrf.mxu0
        %v863 = vadd.f32 0.0, %v862
        %864 = vmatmul.f32.gmra.mxu0 %v735
        %v865 = vpop.f32.mrf.mxu0
        %v866 = vadd.f32 0.0, %v865
        %867 = vmatmul.f32.gmra.mxu0 %v737
        %v868 = vpop.f32.mrf.mxu0
        %v869 = vadd.f32 0.0, %v868
        %870 = vdwg.mxu0
        %871 = vmatpush.msra.mxu0 0.0
        %872 = vmatpush.msra.mxu0 0.0
        %873 = vmatpush.msra.mxu0 0.0
        %874 = vmatpush.msra.mxu0 0.0
        %875 = vmatpush.msra.mxu0 0.0
        %876 = vmatpush.msra.mxu0 0.0
        %877 = vmatpush.msra.mxu0 0.0
        %878 = vmatpush.msra.mxu0 0.0
        %879 = vmatpush.msra.mxu0 0.0
        %880 = vmatpush.msra.mxu0 0.0
        %881 = vmatpush.msra.mxu0 0.0
        %882 = vmatpush.msra.mxu0 0.0
        %883 = vmatpush.msra.mxu0 0.0
        %884 = vmatpush.msra.mxu0 0.0
        %885 = vmatpush.msra.mxu0 %v757
        %886 = vmatpush.msra.mxu0 %v756
        %887 = vmatmul.f32.gmra.mxu0 %v759
        %v888 = vpop.f32.mrf.mxu0
        %v889 = vadd.f32 %v824, %v888
        %890 = vmatmul.f32.gmra.mxu0 %v762
        %v891 = vpop.f32.mrf.mxu0
        %v892 = vadd.f32 %v827, %v891
        %893 = vmatmul.f32.gmra.mxu0 %v765
        %v894 = vpop.f32.mrf.mxu0
        %v895 = vadd.f32 %v830, %v894
        %896 = vmatmul.f32.gmra.mxu0 %v768
        %v897 = vpop.f32.mrf.mxu0
        %v898 = vadd.f32 %v833, %v897
        %899 = vmatmul.f32.gmra.mxu0 %v771
        %v900 = vpop.f32.mrf.mxu0
        %v901 = vadd.f32 %v836, %v900
        %902 = vmatmul.f32.gmra.mxu0 %v774
        %v903 = vpop.f32.mrf.mxu0
        %v904 = vadd.f32 %v839, %v903
        %905 = vmatmul.f32.gmra.mxu0 %v777
        %v906 = vpop.f32.mrf.mxu0
        %v907 = vadd.f32 %v842, %v906
        %908 = vmatmul.f32.gmra.mxu0 %v780
        %v909 = vpop.f32.mrf.mxu0
        %v910 = vadd.f32 %v845, %v909
        %911 = vmatmul.f32.gmra.mxu0 %v783
        %v912 = vpop.f32.mrf.mxu0
        %v913 = vadd.f32 %v848, %v912
        %914 = vmatmul.f32.gmra.mxu0 %v786
        %v915 = vpop.f32.mrf.mxu0
        %v916 = vadd.f32 %v851, %v915
        %917 = vmatmul.f32.gmra.mxu0 %v789
        %v918 = vpop.f32.mrf.mxu0
        %v919 = vadd.f32 %v854, %v918
        %920 = vmatmul.f32.gmra.mxu0 %v792
        %v921 = vpop.f32.mrf.mxu0
        %v922 = vadd.f32 %v857, %v921
        %923 = vmatmul.f32.gmra.mxu0 %v795
        %v924 = vpop.f32.mrf.mxu0
        %v925 = vadd.f32 %v860, %v924
        %926 = vmatmul.f32.gmra.mxu0 %v798
        %v927 = vpop.f32.mrf.mxu0
        %v928 = vadd.f32 %v863, %v927
        %929 = vmatmul.f32.gmra.mxu0 %v801
        %v930 = vpop.f32.mrf.mxu0
        %v931 = vadd.f32 %v866, %v930
        %932 = vmatmul.f32.gmra.mxu0 %v804
        %v933 = vpop.f32.mrf.mxu0
        %v934 = vadd.f32 %v869, %v933
        %935 = vdwg.mxu0
        %v936 = vadd.f32 %v659, %v889
        %v937 = vadd.f32 %v662, %v892
        %v938 = vadd.f32 %v665, %v895
        %v939 = vadd.f32 %v668, %v898
        %v940 = vadd.f32 %v671, %v901
        %v941 = vadd.f32 %v674, %v904
        %v942 = vadd.f32 %v677, %v907
        %v943 = vadd.f32 %v680, %v910
        %v944 = vadd.f32 %v683, %v913
        %v945 = vadd.f32 %v686, %v916
        %v946 = vadd.f32 %v689, %v919
        %v947 = vadd.f32 %v692, %v922
        %v948 = vadd.f32 %v695, %v925
        %v949 = vadd.f32 %v698, %v928
        %v950 = vadd.f32 %v701, %v931
        %v951 = vadd.f32 %v704, %v934
        %v952 = vld [vmem:[%s2] sm:$0x1]
        %v954 = vperm.slane %v952, 0
        %v956 = vadd.f32 %v936, %v954
        %v957 = vadd.f32 %v937, %v954
        %v958 = vadd.f32 %v938, %v954
        %v959 = vadd.f32 %v939, %v954
        %v960 = vadd.f32 %v940, %v954
        %v961 = vadd.f32 %v941, %v954
        %v962 = vadd.f32 %v942, %v954
        %v963 = vadd.f32 %v943, %v954
        %v964 = vadd.f32 %v944, %v954
        %v965 = vadd.f32 %v945, %v954
        %v966 = vadd.f32 %v946, %v954
        %v967 = vadd.f32 %v947, %v954
        %v968 = vadd.f32 %v948, %v954
        %v969 = vadd.f32 %v949, %v954
        %v970 = vadd.f32 %v950, %v954
        %v971 = vadd.f32 %v951, %v954
        %v972 = vmax.f32 %v956, 0.0
        %v973 = vmax.f32 %v957, 0.0
        %v974 = vmax.f32 %v958, 0.0
        %v975 = vmax.f32 %v959, 0.0
        %v976 = vmax.f32 %v960, 0.0
        %v977 = vmax.f32 %v961, 0.0
        %v978 = vmax.f32 %v962, 0.0
        %v979 = vmax.f32 %v963, 0.0
        %v980 = vmax.f32 %v964, 0.0
        %v981 = vmax.f32 %v965, 0.0
        %v982 = vmax.f32 %v966, 0.0
        %v983 = vmax.f32 %v967, 0.0
        %v984 = vmax.f32 %v968, 0.0
        %v985 = vmax.f32 %v969, 0.0
        %v986 = vmax.f32 %v970, 0.0
        %v987 = vmax.f32 %v971, 0.0
        %v988 = vld [vmem:[%s3] sm:$0xff]
        %v989 = vld [vmem:[%s4] sm:$0x1]
        %v991 = vperm.slane %v989, 0
        %vm993 = vcmask 64512
        %v995 = vsel %vm993, %v972, 0
        %v998 = vsel %vm993, %v973, 0
        %v1001 = vsel %vm993, %v974, 0
        %v1004 = vsel %vm993, %v975, 0
        %v1007 = vsel %vm993, %v976, 0
        %v1010 = vsel %vm993, %v977, 0
        %v1013 = vsel %vm993, %v978, 0
        %v1016 = vsel %vm993, %v979, 0
        %v1019 = vsel %vm993, %v980, 0
        %v1022 = vsel %vm993, %v981, 0
        %v1025 = vsel %vm993, %v982, 0
        %v1028 = vsel %vm993, %v983, 0
        %v1031 = vsel %vm993, %v984, 0
        %v1034 = vsel %vm993, %v985, 0
        %v1037 = vsel %vm993, %v986, 0
        %v1040 = vsel %vm993, %v987, 0
        %1042 = vmatpush.msra.mxu0 0.0
        %1043 = vmatpush.msra.mxu0 0.0
        %1044 = vmatpush.msra.mxu0 0.0
        %1045 = vmatpush.msra.mxu0 0.0
        %1046 = vmatpush.msra.mxu0 0.0
        %1047 = vmatpush.msra.mxu0 0.0
        %1048 = vmatpush.msra.mxu0 0.0
        %1049 = vmatpush.msra.mxu0 0.0
        %1050 = vmatpush.msra.mxu0 0.0
        %1051 = vmatpush.msra.mxu0 0.0
        %1052 = vmatpush.msra.mxu0 0.0
        %1053 = vmatpush.msra.mxu0 0.0
        %1054 = vmatpush.msra.mxu0 0.0
        %1055 = vmatpush.msra.mxu0 0.0
        %1056 = vmatpush.msra.mxu0 0.0
        %1057 = vmatpush.msra.mxu0 %v988
        %1058 = vmatmul.f32.gmra.mxu0 %v995
        %v1059 = vpop.f32.mrf.mxu0
        %v1060 = vadd.f32 %v991, %v1059
        %1061 = vmatmul.f32.gmra.mxu0 %v998
        %v1062 = vpop.f32.mrf.mxu0
        %v1063 = vadd.f32 %v991, %v1062
        %1064 = vmatmul.f32.gmra.mxu0 %v1001
        %v1065 = vpop.f32.mrf.mxu0
        %v1066 = vadd.f32 %v991, %v1065
        %1067 = vmatmul.f32.gmra.mxu0 %v1004
        %v1068 = vpop.f32.mrf.mxu0
        %v1069 = vadd.f32 %v991, %v1068
        %1070 = vmatmul.f32.gmra.mxu0 %v1007
        %v1071 = vpop.f32.mrf.mxu0
        %v1072 = vadd.f32 %v991, %v1071
        %1073 = vmatmul.f32.gmra.mxu0 %v1010
        %v1074 = vpop.f32.mrf.mxu0
        %v1075 = vadd.f32 %v991, %v1074
        %1076 = vmatmul.f32.gmra.mxu0 %v1013
        %v1077 = vpop.f32.mrf.mxu0
        %v1078 = vadd.f32 %v991, %v1077
        %1079 = vmatmul.f32.gmra.mxu0 %v1016
        %v1080 = vpop.f32.mrf.mxu0
        %v1081 = vadd.f32 %v991, %v1080
        %1082 = vmatmul.f32.gmra.mxu0 %v1019
        %v1083 = vpop.f32.mrf.mxu0
        %v1084 = vadd.f32 %v991, %v1083
        %1085 = vmatmul.f32.gmra.mxu0 %v1022
        %v1086 = vpop.f32.mrf.mxu0
        %v1087 = vadd.f32 %v991, %v1086
        %1088 = vmatmul.f32.gmra.mxu0 %v1025
        %v1089 = vpop.f32.mrf.mxu0
        %v1090 = vadd.f32 %v991, %v1089
        %1091 = vmatmul.f32.gmra.mxu0 %v1028
        %v1092 = vpop.f32.mrf.mxu0
        %v1093 = vadd.f32 %v991, %v1092
        %1094 = vmatmul.f32.gmra.mxu0 %v1031
        %v1095 = vpop.f32.mrf.mxu0
        %v1096 = vadd.f32 %v991, %v1095
        %1097 = vmatmul.f32.gmra.mxu0 %v1034
        %v1098 = vpop.f32.mrf.mxu0
        %v1099 = vadd.f32 %v991, %v1098
        %1100 = vmatmul.f32.gmra.mxu0 %v1037
        %v1101 = vpop.f32.mrf.mxu0
        %v1102 = vadd.f32 %v991, %v1101
        %1103 = vmatmul.f32.gmra.mxu0 %v1040
        %v1104 = vpop.f32.mrf.mxu0
        %v1105 = vadd.f32 %v991, %v1104
        %1106 = vdwg.mxu0
        %vm1107 = vcmask 80896
        %v1108 = vsel %vm1107, %v1060, -inf
        %1109 = vmax.xlane.f32.xlu0 %v1108
        %v1110 = vpop.xlane.xlu0 %1109
        %v1111 = vsel %vm1107, %v1063, -inf
        %1112 = vmax.xlane.f32.xlu0 %v1111
        %v1113 = vpop.xlane.xlu0 %1112
        %v1114 = vsel %vm1107, %v1066, -inf
        %1115 = vmax.xlane.f32.xlu0 %v1114
        %v1116 = vpop.xlane.xlu0 %1115
        %v1117 = vsel %vm1107, %v1069, -inf
        %1118 = vmax.xlane.f32.xlu0 %v1117
        %v1119 = vpop.xlane.xlu0 %1118
        %v1120 = vsel %vm1107, %v1072, -inf
        %1121 = vmax.xlane.f32.xlu0 %v1120
        %v1122 = vpop.xlane.xlu0 %1121
        %v1123 = vsel %vm1107, %v1075, -inf
        %1124 = vmax.xlane.f32.xlu0 %v1123
        %v1125 = vpop.xlane.xlu0 %1124
        %v1126 = vsel %vm1107, %v1078, -inf
        %1127 = vmax.xlane.f32.xlu0 %v1126
        %v1128 = vpop.xlane.xlu0 %1127
        %v1129 = vsel %vm1107, %v1081, -inf
        %1130 = vmax.xlane.f32.xlu0 %v1129
        %v1131 = vpop.xlane.xlu0 %1130
        %v1132 = vsel %vm1107, %v1084, -inf
        %1133 = vmax.xlane.f32.xlu0 %v1132
        %v1134 = vpop.xlane.xlu0 %1133
        %v1135 = vsel %vm1107, %v1087, -inf
        %1136 = vmax.xlane.f32.xlu0 %v1135
        %v1137 = vpop.xlane.xlu0 %1136
        %v1138 = vsel %vm1107, %v1090, -inf
        %1139 = vmax.xlane.f32.xlu0 %v1138
        %v1140 = vpop.xlane.xlu0 %1139
        %v1141 = vsel %vm1107, %v1093, -inf
        %1142 = vmax.xlane.f32.xlu0 %v1141
        %v1143 = vpop.xlane.xlu0 %1142
        %v1144 = vsel %vm1107, %v1096, -inf
        %1145 = vmax.xlane.f32.xlu0 %v1144
        %v1146 = vpop.xlane.xlu0 %1145
        %v1147 = vsel %vm1107, %v1099, -inf
        %1148 = vmax.xlane.f32.xlu0 %v1147
        %v1149 = vpop.xlane.xlu0 %1148
        %v1150 = vsel %vm1107, %v1102, -inf
        %1151 = vmax.xlane.f32.xlu0 %v1150
        %v1152 = vpop.xlane.xlu0 %1151
        %v1153 = vsel %vm1107, %v1105, -inf
        %1154 = vmax.xlane.f32.xlu0 %v1153
        %v1155 = vpop.xlane.xlu0 %1154
        %v1156 = vsub.f32 %v1060, %v1110
        %v1157 = vsub.f32 %v1063, %v1113
        %v1158 = vsub.f32 %v1066, %v1116
        %v1159 = vsub.f32 %v1069, %v1119
        %v1160 = vsub.f32 %v1072, %v1122
        %v1161 = vsub.f32 %v1075, %v1125
        %v1162 = vsub.f32 %v1078, %v1128
        %v1163 = vsub.f32 %v1081, %v1131
        %v1164 = vsub.f32 %v1084, %v1134
        %v1165 = vsub.f32 %v1087, %v1137
        %v1166 = vsub.f32 %v1090, %v1140
        %v1167 = vsub.f32 %v1093, %v1143
        %v1168 = vsub.f32 %v1096, %v1146
        %v1169 = vsub.f32 %v1099, %v1149
        %v1170 = vsub.f32 %v1102, %v1152
        %v1171 = vsub.f32 %v1105, %v1155
        %v1172 = vmul.f32 %v1156, 1.442695
        %v1173 = vpow.pop %v1172
        %v1174 = vmul.f32 %v1157, 1.442695
        %v1175 = vpow.pop %v1174
        %v1176 = vmul.f32 %v1158, 1.442695
        %v1177 = vpow.pop %v1176
        %v1178 = vmul.f32 %v1159, 1.442695
        %v1179 = vpow.pop %v1178
        %v1180 = vmul.f32 %v1160, 1.442695
        %v1181 = vpow.pop %v1180
        %v1182 = vmul.f32 %v1161, 1.442695
        %v1183 = vpow.pop %v1182
        %v1184 = vmul.f32 %v1162, 1.442695
        %v1185 = vpow.pop %v1184
        %v1186 = vmul.f32 %v1163, 1.442695
        %v1187 = vpow.pop %v1186
        %v1188 = vmul.f32 %v1164, 1.442695
        %v1189 = vpow.pop %v1188
        %v1190 = vmul.f32 %v1165, 1.442695
        %v1191 = vpow.pop %v1190
        %v1192 = vmul.f32 %v1166, 1.442695
        %v1193 = vpow.pop %v1192
        %v1194 = vmul.f32 %v1167, 1.442695
        %v1195 = vpow.pop %v1194
        %v1196 = vmul.f32 %v1168, 1.442695
        %v1197 = vpow.pop %v1196
        %v1198 = vmul.f32 %v1169, 1.442695
        %v1199 = vpow.pop %v1198
        %v1200 = vmul.f32 %v1170, 1.442695
        %v1201 = vpow.pop %v1200
        %v1202 = vmul.f32 %v1171, 1.442695
        %v1203 = vpow.pop %v1202
        %v1204 = vsel %vm1107, %v1173, 0.0
        %1205 = vadd.xlane.f32.xlu0 %v1204
        %v1206 = vpop.xlane.xlu0 %1205
        %v1207 = vsel %vm1107, %v1175, 0.0
        %1208 = vadd.xlane.f32.xlu0 %v1207
        %v1209 = vpop.xlane.xlu0 %1208
        %v1210 = vsel %vm1107, %v1177, 0.0
        %1211 = vadd.xlane.f32.xlu0 %v1210
        %v1212 = vpop.xlane.xlu0 %1211
        %v1213 = vsel %vm1107, %v1179, 0.0
        %1214 = vadd.xlane.f32.xlu0 %v1213
        %v1215 = vpop.xlane.xlu0 %1214
        %v1216 = vsel %vm1107, %v1181, 0.0
        %1217 = vadd.xlane.f32.xlu0 %v1216
        %v1218 = vpop.xlane.xlu0 %1217
        %v1219 = vsel %vm1107, %v1183, 0.0
        %1220 = vadd.xlane.f32.xlu0 %v1219
        %v1221 = vpop.xlane.xlu0 %1220
        %v1222 = vsel %vm1107, %v1185, 0.0
        %1223 = vadd.xlane.f32.xlu0 %v1222
        %v1224 = vpop.xlane.xlu0 %1223
        %v1225 = vsel %vm1107, %v1187, 0.0
        %1226 = vadd.xlane.f32.xlu0 %v1225
        %v1227 = vpop.xlane.xlu0 %1226
        %v1228 = vsel %vm1107, %v1189, 0.0
        %1229 = vadd.xlane.f32.xlu0 %v1228
        %v1230 = vpop.xlane.xlu0 %1229
        %v1231 = vsel %vm1107, %v1191, 0.0
        %1232 = vadd.xlane.f32.xlu0 %v1231
        %v1233 = vpop.xlane.xlu0 %1232
        %v1234 = vsel %vm1107, %v1193, 0.0
        %1235 = vadd.xlane.f32.xlu0 %v1234
        %v1236 = vpop.xlane.xlu0 %1235
        %v1237 = vsel %vm1107, %v1195, 0.0
        %1238 = vadd.xlane.f32.xlu0 %v1237
        %v1239 = vpop.xlane.xlu0 %1238
        %v1240 = vsel %vm1107, %v1197, 0.0
        %1241 = vadd.xlane.f32.xlu0 %v1240
        %v1242 = vpop.xlane.xlu0 %1241
        %v1243 = vsel %vm1107, %v1199, 0.0
        %1244 = vadd.xlane.f32.xlu0 %v1243
        %v1245 = vpop.xlane.xlu0 %1244
        %v1246 = vsel %vm1107, %v1201, 0.0
        %1247 = vadd.xlane.f32.xlu0 %v1246
        %v1248 = vpop.xlane.xlu0 %1247
        %v1249 = vsel %vm1107, %v1203, 0.0
        %1250 = vadd.xlane.f32.xlu0 %v1249
        %v1251 = vpop.xlane.xlu0 %1250
        %v1252 = vlog2.pop %v1206
        %v1253 = vmul.f32 %v1252, 0.6931472
        %v1254 = vlog2.pop %v1209
        %v1255 = vmul.f32 %v1254, 0.6931472
        %v1256 = vlog2.pop %v1212
        %v1257 = vmul.f32 %v1256, 0.6931472
        %v1258 = vlog2.pop %v1215
        %v1259 = vmul.f32 %v1258, 0.6931472
        %v1260 = vlog2.pop %v1218
        %v1261 = vmul.f32 %v1260, 0.6931472
        %v1262 = vlog2.pop %v1221
        %v1263 = vmul.f32 %v1262, 0.6931472
        %v1264 = vlog2.pop %v1224
        %v1265 = vmul.f32 %v1264, 0.6931472
        %v1266 = vlog2.pop %v1227
        %v1267 = vmul.f32 %v1266, 0.6931472
        %v1268 = vlog2.pop %v1230
        %v1269 = vmul.f32 %v1268, 0.6931472
        %v1270 = vlog2.pop %v1233
        %v1271 = vmul.f32 %v1270, 0.6931472
        %v1272 = vlog2.pop %v1236
        %v1273 = vmul.f32 %v1272, 0.6931472
        %v1274 = vlog2.pop %v1239
        %v1275 = vmul.f32 %v1274, 0.6931472
        %v1276 = vlog2.pop %v1242
        %v1277 = vmul.f32 %v1276, 0.6931472
        %v1278 = vlog2.pop %v1245
        %v1279 = vmul.f32 %v1278, 0.6931472
        %v1280 = vlog2.pop %v1248
        %v1281 = vmul.f32 %v1280, 0.6931472
        %v1282 = vlog2.pop %v1251
        %v1283 = vmul.f32 %v1282, 0.6931472
        %v1284 = vadd.f32 %v1110, %v1253
        %v1285 = vadd.f32 %v1113, %v1255
        %v1286 = vadd.f32 %v1116, %v1257
        %v1287 = vadd.f32 %v1119, %v1259
        %v1288 = vadd.f32 %v1122, %v1261
        %v1289 = vadd.f32 %v1125, %v1263
        %v1290 = vadd.f32 %v1128, %v1265
        %v1291 = vadd.f32 %v1131, %v1267
        %v1292 = vadd.f32 %v1134, %v1269
        %v1293 = vadd.f32 %v1137, %v1271
        %v1294 = vadd.f32 %v1140, %v1273
        %v1295 = vadd.f32 %v1143, %v1275
        %v1296 = vadd.f32 %v1146, %v1277
        %v1297 = vadd.f32 %v1149, %v1279
        %v1298 = vadd.f32 %v1152, %v1281
        %v1299 = vadd.f32 %v1155, %v1283
        %v1300 = vsub.f32 %v1060, %v1284
        %v1301 = vsub.f32 %v1063, %v1285
        %v1302 = vsub.f32 %v1066, %v1286
        %v1303 = vsub.f32 %v1069, %v1287
        %v1304 = vsub.f32 %v1072, %v1288
        %v1305 = vsub.f32 %v1075, %v1289
        %v1306 = vsub.f32 %v1078, %v1290
        %v1307 = vsub.f32 %v1081, %v1291
        %v1308 = vsub.f32 %v1084, %v1292
        %v1309 = vsub.f32 %v1087, %v1293
        %v1310 = vsub.f32 %v1090, %v1294
        %v1311 = vsub.f32 %v1093, %v1295
        %v1312 = vsub.f32 %v1096, %v1296
        %v1313 = vsub.f32 %v1099, %v1297
        %v1314 = vsub.f32 %v1102, %v1298
        %v1315 = vsub.f32 %v1105, %v1299
        %1316 = vxpose.xlu0.b32.start [1/16] %v1300, 128
        %1317 = vxpose.xlu0.b32.cont [2/16] %v1301, 128
        %1318 = vxpose.xlu0.b32.cont [3/16] %v1302, 128
        %1319 = vxpose.xlu0.b32.cont [4/16] %v1303, 128
        %1320 = vxpose.xlu0.b32.cont [5/16] %v1304, 128
        %1321 = vxpose.xlu0.b32.cont [6/16] %v1305, 128
        %1322 = vxpose.xlu0.b32.cont [7/16] %v1306, 128
        %1323 = vxpose.xlu0.b32.cont [8/16] %v1307, 128
        %1324 = vxpose.xlu0.b32.cont [9/16] %v1308, 128
        %1325 = vxpose.xlu0.b32.cont [10/16] %v1309, 128
        %1326 = vxpose.xlu0.b32.cont [11/16] %v1310, 128
        %1327 = vxpose.xlu0.b32.cont [12/16] %v1311, 128
        %1328 = vxpose.xlu0.b32.cont [13/16] %v1312, 128
        %1329 = vxpose.xlu0.b32.cont [14/16] %v1313, 128
        %1330 = vxpose.xlu0.b32.cont [15/16] %v1314, 128
        %1331 = vxpose.xlu0.b32.end [16/16] %v1315, 128
        %v1332 = vpop.trf.xlu0
        %v1333 = vpop.trf.xlu0
        %v1334 = vpop.trf.xlu0
        %v1335 = vpop.trf.xlu0
        %v1336 = vpop.trf.xlu0
        %v1337 = vpop.trf.xlu0
        %v1338 = vpop.trf.xlu0
        %v1339 = vpop.trf.xlu0
        %v1340 = vpop.trf.xlu0
        %v1341 = vpop.trf.xlu0
        %v1342 = vpop.trf.xlu0
        %v1343 = vpop.trf.xlu0
        %v1344 = vpop.trf.xlu0
        %v1345 = vpop.trf.xlu0
        %v1346 = vpop.trf.xlu0
        %v1347 = vpop.trf.xlu0
        %1348 = vst [vmem:[%s237] sm:$0xff] %v1332
        %1349 = vst [vmem:[%s237 + $0x8] sm:$0x3] %v1333
        %s1350 = sand.u32 %s150, 1
        %s1351 = sand.u32 %s150, 1
        %s1352 = smul.addr %s1351, 16
        %s1353 = scalar_lea.vmem [#allocation2], %s1352
        // Predicated region
        $region41: #{c1_aggregation_forward.1} parent=39 // pred_check
          %p1354 = pneg %p160
        $region42: #{c1_aggregation_forward.1} parent=39 // pred_check_branch
          %1356 = sbr.rel (%p1354) target = $region44
        $region43: #{c1_aggregation_forward.1} parent=39 // pred_region
          %s1357 = smul.addr %s20, 4
          %s1358 = sadd.s32 %s21, %s1357
          %s1359 = smul.addr %s1358, 8
          %s1360 = scalar_lea.vmem %s5, %s1359
          // Predicated region
          $region45: #{c1_aggregation_forward.1} parent=43 // pred_check
            _
          $region46: #{c1_aggregation_forward.1} parent=43 // pred_check_branch
            %1362 = sbr.rel (0) target = $region48
          $region47: #{c1_aggregation_forward.1} parent=43 // pred_region
            // Predicated region
            $region49: #{c1_aggregation_forward.1} parent=47 // pred_check
              _
            $region50: #{c1_aggregation_forward.1} parent=47 // pred_check_branch
              %1364 = sbr.rel (0) target = $region52
            $region51: #{c1_aggregation_forward.1} parent=47 // pred_region
              // Predicated region
              $region64: #{c1_aggregation_forward.1} parent=51 // pred_check
                _
              $region65: #{c1_aggregation_forward.1} parent=51 // pred_check_branch
                %1382 = sbr.rel (0) target = $region67
              $region66: #{c1_aggregation_forward.1} parent=51 // pred_region
                loop: start=0, step=1, limit=1
                $region68: #{c1_aggregation_forward.1} parent=66 // loop_pre_header
                  _
                $region69: #{c1_aggregation_forward.1} parent=66 // loop_header
                  %s1384 = sphi 0, %s1388
                  %p1385 = scmp.ge.s32.totalorder %s1384, 1
                  %s1389 = sphi %s1353, %s1353
                  %s1390 = sphi %s1360, %s1360
                $region70: #{c1_aggregation_forward.1} parent=66 // loop_header_branch
                  %1387 = sbr.rel (%p1385) target = $region74
                $region71: #{c1_aggregation_forward.1} parent=66 // loop_body
                  %v1391 = vld [vmem:[%s1389] sm:$0xff]
                  %1392 = vst [vmem:[%s1390] sm:$0xff] %v1391
                  %v1393 = vld [vmem:[%s1389 + $0x8] sm:$0xff]
                  %1394 = vst [vmem:[%s1390 + $0x10] sm:$0xff] %v1393
                $region72: #{c1_aggregation_forward.1} parent=66 // loop_footer
                  %s1388 = sadd.s32 1, %s1384
                $region73: #{c1_aggregation_forward.1} parent=66 // loop_footer_branch
                  %1383 = sbr.rel target = $region69
                $region74: #{c1_aggregation_forward.1} parent=66 // loop_exit
                  _
              $region67: #{c1_aggregation_forward.1} parent=51 // pred_fallthru
                _
              // Predicated region
              $region75: #{c1_aggregation_forward.1} parent=51 // pred_check
                _
              $region76: #{c1_aggregation_forward.1} parent=51 // pred_check_branch
                %1396 = sbr.rel target = $region78
              $region77: #{c1_aggregation_forward.1} parent=51 // pred_region
                _
              $region78: #{c1_aggregation_forward.1} parent=51 // pred_fallthru
                _
            $region52: #{c1_aggregation_forward.1} parent=47 // pred_fallthru
              _
            // Predicated region
            $region53: #{c1_aggregation_forward.1} parent=47 // pred_check
              _
            $region54: #{c1_aggregation_forward.1} parent=47 // pred_check_branch
              %1366 = sbr.rel target = $region56
            $region55: #{c1_aggregation_forward.1} parent=47 // pred_region
              %s1368 = ssub.s32 256, 1
              loop: start=0, step=1, limit=1
              $region57: #{c1_aggregation_forward.1} parent=55 // loop_pre_header
                _
              $region58: #{c1_aggregation_forward.1} parent=55 // loop_header
                %s1370 = sphi 0, %s1374
                %p1371 = scmp.ge.s32.totalorder %s1370, 1
                %s1375 = sphi %s1353, %s1353
                %s1376 = sphi %s1360, %s1360
              $region59: #{c1_aggregation_forward.1} parent=55 // loop_header_branch
                %1373 = sbr.rel (%p1371) target = $region63
              $region60: #{c1_aggregation_forward.1} parent=55 // loop_body
                %v1377 = vld [vmem:[%s1375] sm:%s1368]
                %1378 = vst [vmem:[%s1376] sm:%s1368] %v1377
                %v1379 = vld [vmem:[%s1375 + $0x8] sm:%s1368]
                %1380 = vst [vmem:[%s1376 + $0x10] sm:%s1368] %v1379
              $region61: #{c1_aggregation_forward.1} parent=55 // loop_footer
                %s1374 = sadd.s32 1, %s1370
              $region62: #{c1_aggregation_forward.1} parent=55 // loop_footer_branch
                %1369 = sbr.rel target = $region58
              $region63: #{c1_aggregation_forward.1} parent=55 // loop_exit
                _
            $region56: #{c1_aggregation_forward.1} parent=47 // pred_fallthru
              _
          $region48: #{c1_aggregation_forward.1} parent=43 // pred_fallthru
            _
          %1397 = vnop
        $region44: #{c1_aggregation_forward.1} parent=39 // pred_fallthru
          _
      $region40: #{c1_aggregation_forward.1} parent=5 // pred_fallthru
        _
      %p1398 = scmp.le.s32.totalorder 2, %s11
      // Predicated region
      $region79: #{c1_aggregation_forward.1} parent=5 // pred_check
        %p1399 = pneg %p1398
      $region80: #{c1_aggregation_forward.1} parent=5 // pred_check_branch
        %1401 = sbr.rel (%p1399) target = $region82
      $region81: #{c1_aggregation_forward.1} parent=5 // pred_region
        %s1402 = ssub.s32 %s11, 2
        // Predicated region
        $region83: #{c1_aggregation_forward.1} parent=81 // pred_check
          %p1403 = pneg %p166
        $region84: #{c1_aggregation_forward.1} parent=81 // pred_check_branch
          %1405 = sbr.rel (%p1403) target = $region86
        $region85: #{c1_aggregation_forward.1} parent=81 // pred_region
          %s1406 = sand.u32 %s151, 1
          %s1407 = sand.u32 %s151, 1
          %s1408 = smul.addr %s1407, 16
          %s1409 = scalar_lea.vmem [#allocation2], %s1408
        $region86: #{c1_aggregation_forward.1} parent=81 // pred_fallthru
          _
      $region82: #{c1_aggregation_forward.1} parent=5 // pred_fallthru
        _
    $region6: #{c1_aggregation_forward.1} parent=1 // loop_footer
      %s15 = sadd.s32 1, %s11
    $region7: #{c1_aggregation_forward.1} parent=1 // loop_footer_branch
      %10 = sbr.rel target = $region3
    $region8: #{c1_aggregation_forward.1} parent=1 // loop_exit
      _

</llo_original>
